<compile_context>
chip_gen: v7x
topology: tpu7x:2x2x1
jax: 0.10.0
libtpu: 0.0.40
codegen_flags: <defaults>
</compile_context>

<pallas_src>
import functools

import numpy as np
import jax
import jax.numpy as jnp
from jax.experimental import pallas as pl
from jax.experimental.pallas import tpu as pltpu


# ----------------------------------------------------------------- utilities

def _round_up(x, m):
    return -(-x // m) * m


def _pad_lanes(x, Mp):
    if x.shape[-1] == Mp:
        return x
    return jnp.pad(x, [(0, 0)] * (x.ndim - 1) + [(0, Mp - x.shape[-1])])


_VMEM_LIMIT = None


def _vmem_limit():
    global _VMEM_LIMIT
    if _VMEM_LIMIT is None:
        try:
            cap = int(pltpu.get_tpu_info().vmem_capacity_bytes)
            # v7x: ~48 MiB of 64; v5e/v6e: 96 MiB of 128.
            _VMEM_LIMIT = min((cap * 3) // 4, 96 * 1024 * 1024)
        except Exception:
            _VMEM_LIMIT = 32 * 1024 * 1024
    return _VMEM_LIMIT


def _compiler_params(sem):
    return pltpu.CompilerParams(dimension_semantics=sem,
                                vmem_limit_bytes=_vmem_limit())


# ------------------------------------------------ single-buffered const spec

_BUFFERED_OK = None            # resolved once, OUTSIDE jit, in __main__


def _probe_buffered():
    def _copy(x_ref, o_ref):
        o_ref[...] = x_ref[...] + 1.0
    spec = pl.BlockSpec((8, 128), lambda i: (0, 0), pipeline_mode=pl.Buffered(1))
    fn = pl.pallas_call(
        _copy,
        out_shape=jax.ShapeDtypeStruct((8, 128), jnp.float32),
        grid=(1,),
        in_specs=[spec],
        out_specs=pl.BlockSpec((8, 128), lambda i: (0, 0)))
    jax.block_until_ready(fn(jnp.zeros((8, 128), jnp.float32)))


def _buffered_ok():
    global _BUFFERED_OK
    if _BUFFERED_OK is None:
        try:
            _probe_buffered()
            _BUFFERED_OK = True
        except Exception:
            _BUFFERED_OK = False
    return _BUFFERED_OK


def _const_spec(shape):
    """BlockSpec for a grid-invariant, fully resident constant (2-D grid)."""
    nd = len(shape)
    imap = lambda i, j: (0,) * nd
    if _BUFFERED_OK:                      # single-buffer resident constants
        return pl.BlockSpec(shape, imap, pipeline_mode=pl.Buffered(1))
    return pl.BlockSpec(shape, imap)


# ------------------------------------------------------- conv1 (1x1, split)

def _conv1_kernel(x_ref, w_ref, b_ref, x1_ref, x2_ref):
    # x: (1, Cin, tm) f32  w: (2C, Cin) f32  b: (2C, 1) f32
    y = jnp.dot(w_ref[...], x_ref[0], preferred_element_type=jnp.float32)
    y = y + b_ref[...]
    C = x1_ref.shape[1]
    x1_ref[0] = y[:C].astype(x1_ref.dtype)
    x2_ref[0] = y[C:].astype(x2_ref.dtype)


def conv1_split(x, w, b, *, Mp, tm):
    """1x1 conv (Cin -> 2C) with pixels on the lane axis; two bf16 outputs."""
    N, Cin, M = x.shape
    C2 = w.shape[0]
    C = C2 // 2
    xm = _pad_lanes(x.astype(jnp.float32), Mp)
    wm = jnp.asarray(w, jnp.float32).reshape(C2, Cin)
    bm = jnp.asarray(b, jnp.float32).reshape(C2, 1)
    x1, x2 = pl.pallas_call(
        _conv1_kernel,
        out_shape=(jax.ShapeDtypeStruct((N, C, Mp), jnp.bfloat16),
                   jax.ShapeDtypeStruct((N, C, Mp), jnp.bfloat16)),
        grid=(N, Mp // tm),
        in_specs=[pl.BlockSpec((1, Cin, tm), lambda n, m: (n, 0, m)),
                  _const_spec((C2, Cin)),
                  _const_spec((C2, 1))],
        out_specs=[pl.BlockSpec((1, C, tm), lambda n, m: (n, 0, m)),
                   pl.BlockSpec((1, C, tm), lambda n, m: (n, 0, m))],
        compiler_params=_compiler_params(("parallel", "parallel")),
    )(xm, wm, bm)
    return x1, x2


# ------------------- conv3 (1x1 on cat[folded/count, x2], scale fused in)

def _conv3_kernel(f_ref, x2_ref, ic_ref, wa_ref, wb_ref, b_ref, o_ref):
    # inv_count is per-lane, so it commutes with the channel mix.
    ya = jnp.dot(wa_ref[...], f_ref[0],
                 preferred_element_type=jnp.float32) * ic_ref[...]
    yb = jnp.dot(wb_ref[...], x2_ref[0], preferred_element_type=jnp.float32)
    o_ref[0] = (ya + yb + b_ref[...]).astype(o_ref.dtype)


def conv3_fused(folded, x2, inv_cnt, w3, b3, *, Mp, tm):
    N, C, _ = folded.shape
    Cout = w3.shape[0]
    w3m = jnp.asarray(w3, jnp.float32).reshape(Cout, 2 * C)
    wa = w3m[:, :C].astype(jnp.bfloat16)
    wb = w3m[:, C:].astype(jnp.bfloat16)
    bm = jnp.asarray(b3, jnp.float32).reshape(Cout, 1)
    fm = _pad_lanes(folded, Mp)
    x2m = _pad_lanes(x2, Mp)
    ic = _pad_lanes(jnp.asarray(inv_cnt, jnp.float32), Mp)
    return pl.pallas_call(
        _conv3_kernel,
        out_shape=jax.ShapeDtypeStruct((N, Cout, Mp), jnp.float32),
        grid=(N, Mp // tm),
        in_specs=[pl.BlockSpec((1, C, tm), lambda n, m: (n, 0, m)),
                  pl.BlockSpec((1, C, tm), lambda n, m: (n, 0, m)),
                  pl.BlockSpec((1, tm), lambda n, m: (0, m)),
                  _const_spec((Cout, C)),
                  _const_spec((Cout, C)),
                  _const_spec((Cout, 1))],
        out_specs=pl.BlockSpec((1, Cout, tm), lambda n, m: (n, 0, m)),
        compiler_params=_compiler_params(("parallel", "parallel")),
    )(fm, x2m, ic, wa, wb, bm)


# ------ fused window branch: pad+unfold+pool + (conv2 ⊕ 3x3) + SE + residual

def _window_kernel(x1_ref, rg_ref, wst_ref, bias_ref, msk_ref,
                   w1_ref, w2_ref, mavg_ref, mexp_ref, o_ref, *, C, shifts):
    x = x1_ref[0].astype(jnp.float32)                       # (C, Mp)
    # replicate-pad + unfold + adaptive pool of this window group: one matmul.
    pooled = jnp.dot(x, rg_ref[0], preferred_element_type=jnp.float32)  # (C, Lg)
    # All 9 3x3 taps' channel mixes in one stacked matmul (conv2 merged @ k=4).
    big = jnp.dot(wst_ref[...], pooled,
                  preferred_element_type=jnp.float32)       # (9C, Lg)
    L = o_ref.shape[-1]
    acc = jnp.zeros((C, L), jnp.float32)
    for k, sh in enumerate(shifts):                         # static 9-tap unroll
        t = big[k * C:(k + 1) * C]
        if sh:                                              # XLU lane rotate
            t = pltpu.roll(t, sh, 1)
        acc = acc + t * msk_ref[k:k + 1, :]
    pr = acc + bias_ref[...]                                # conv2 + position
    # SE attention; the "+ pr" residual folded into the (sigmoid + 1) scale.
    y = jnp.dot(pr, mavg_ref[...], preferred_element_type=jnp.float32)  # (C,nwg)
    z = jnp.maximum(jnp.dot(w1_ref[...], y,
                            preferred_element_type=jnp.float32), 0.0)
    v = jnp.dot(w2_ref[...], z, preferred_element_type=jnp.float32)
    s = 1.0 / (1.0 + jnp.exp(-v)) + 1.0
    o_ref[0, 0] = (pr * jnp.dot(s, mexp_ref[...],
                                preferred_element_type=jnp.float32)
                   ).astype(o_ref.dtype)


def window_branch(x1, rg, wstack, bias, masks, w1, w2, mavg, mexp, *, shifts):
    N, C, Mp = x1.shape
    G, _, Lg = rg.shape
    kern = functools.partial(_window_kernel, C=C, shifts=tuple(shifts))
    return pl.pallas_call(
        kern,
        out_shape=jax.ShapeDtypeStruct((N, G, C, Lg), jnp.bfloat16),
        grid=(N, G),
        in_specs=[pl.BlockSpec((1, C, Mp), lambda n, g: (n, 0, 0)),
                  pl.BlockSpec((1, Mp, Lg), lambda n, g: (g, 0, 0)),
                  _const_spec(wstack.shape),
                  _const_spec(bias.shape),
                  _const_spec(masks.shape),
                  _const_spec(w1.shape),
                  _const_spec(w2.shape),
                  _const_spec(mavg.shape),
                  _const_spec(mexp.shape)],
        out_specs=pl.BlockSpec((1, 1, C, Lg), lambda n, g: (n, g, 0, 0)),
        compiler_params=_compiler_params(("parallel", "parallel")),
    )(x1, rg, wstack, bias, masks, w1, w2, mavg, mexp)


# ---------------------------------------------------- trace-time constants

def _pool_matrix(out_h, out_w, in_h, in_w):
    """Exact PyTorch AdaptiveAvgPool2d as an (out_h*out_w, in_h*in_w) matrix."""
    P = np.zeros((out_h * out_w, in_h * in_w), np.float32)
    for i in range(out_h):
        hs, he = (i * in_h) // out_h, -(-((i + 1) * in_h) // out_h)
        for j in range(out_w):
            ws, we = (j * in_w) // out_w, -(-((j + 1) * in_w) // out_w)
            v = 1.0 / ((he - hs) * (we - ws))
            for ph in range(hs, he):
                for pw in range(ws, we):
                    P[i * out_w + j, ph * in_w + pw] = v
    return P


def _group_pool_matrices(H, W, Mp, e, nw, nwg, n_groups,
                         hp_s, hp_k, wp_s, wp_k, h_k, w_k):
    """rg[g]: (Mp, nwg*HK) — replicate-pad + unfold + adaptive pool for window
    group g, taking lane-dense x1 pixels straight to pooled window pixels."""
    HK, PK = h_k * w_k, hp_k * wp_k
    P = _pool_matrix(h_k, w_k, hp_k, wp_k)                  # (HK, PK)
    rg = np.zeros((n_groups, Mp, nwg * HK), np.float32)
    for g in range(n_groups):
        for wl in range(nwg):
            wy, wx = divmod(g * nwg + wl, nw)
            for h in range(HK):
                for p in range(PK):
                    c = P[h, p]
                    if c == 0.0:
                        continue
                    ii = min(max(wy * hp_s + p // wp_k - e, 0), H - 1)
                    jj = min(max(wx * wp_s + p % wp_k - e, 0), W - 1)
                    rg[g, ii * W + jj, wl * HK + h] += c
    return rg


def _tap_shifts_masks(h_k, w_k, nwg):
    """Per-tap uniform lane shift + 0/1 validity mask for the zero-padded 3x3
    conv applied on the (nwg windows x HK pixels) lane axis."""
    HK = h_k * w_k
    L = nwg * HK
    shifts, masks = [], np.zeros((9, L), np.float32)
    for kh in range(3):
        for kw in range(3):
            k = kh * 3 + kw
            delta = (kh - 1) * w_k + (kw - 1)
            shifts.append(int((-delta) % L))
            m = np.zeros(HK, np.float32)
            for r in range(h_k):
                for c in range(w_k):
                    if 0 <= r + kh - 1 < h_k and 0 <= c + kw - 1 < w_k:
                        m[r * w_k + c] = 1.0
            masks[k] = np.tile(m, nwg)
    return shifts, masks


def _fold_inv_count(H, W, h_s, h_k, w_s, w_k, nw):
    cnt = np.zeros((H, W), np.float32)
    for wy in range(nw):
        for wx in range(nw):
            cnt[wy * h_s:wy * h_s + h_k, wx * w_s:wx * w_s + w_k] += 1.0
    return (1.0 / cnt).reshape(1, H * W)


def _pick_groups(nw2, HK):
    """Largest divisor of nw^2 keeping the per-group lane width >= 128."""
    best = 1
    for g in range(1, nw2 + 1):
        if nw2 % g == 0 and (nw2 // g) * HK >= 128:
            best = g
    return best


# -------------------------------------------------------------------- DPConv

def dpconv_forward(x, params, extension, num_windows):
    N, C, H, W = x.shape
    nw, e = num_windows, extension
    nw2 = nw * nw
    HW = H * W

    # Shared lane tiling for the pointwise convs (large lane-dense tiles).
    tm = min(1024, _round_up(HW, 128))
    Mp = _round_up(HW, tm)

    # ---- conv1 (1x1) -> x1, x2 (both bf16, lane-dense) ----------------------
    x1, x2 = conv1_split(x.reshape(N, C, HW), params["conv1_w"],
                         params["conv1_b"], Mp=Mp, tm=tm)

    # ---- window geometry (matches the PyTorch module) -----------------------
    Hp, Wp = H + 2 * e, W + 2 * e
    h_s, h_k = H // nw, H // nw + H % nw
    w_s, w_k = W // nw, W // nw + W % nw
    hp_s, hp_k = Hp // nw, Hp // nw + Hp % nw
    wp_s, wp_k = Wp // nw, Wp // nw + Wp % nw
    HK = h_k * w_k

    Gw = _pick_groups(nw2, HK)          # second "parallel" grid axis (v7x)
    nwg = nw2 // Gw
    Lg = nwg * HK

    # ---- trace-time constants ------------------------------------------------
    rg = jnp.asarray(_group_pool_matrices(H, W, Mp, e, nw, nwg, Gw,
                                          hp_s, hp_k, wp_s, wp_k, h_k, w_k))
    shifts, masks_np = _tap_shifts_masks(h_k, w_k, nwg)
    masks = jnp.asarray(masks_np)
    mavg = jnp.asarray(np.kron(np.eye(nwg, dtype=np.float32),
                               np.full((HK, 1), 1.0 / HK, np.float32)))
    mexp = jnp.asarray(np.kron(np.eye(nwg, dtype=np.float32),
                               np.ones((1, HK), np.float32)))
    inv_cnt = jnp.asarray(_fold_inv_count(H, W, h_s, h_k, w_s, w_k, nw))

    # conv2 (1x1) merged into the centre tap of the 3x3 position conv; the 9
    # tap weights stacked into a single (9C, C) channel-mix matrix.
    wf = jnp.transpose(jnp.asarray(params["pos_w"], jnp.float32).reshape(C, C, 9),
                       (2, 0, 1))
    wf = wf.at[4].add(jnp.asarray(params["conv2_w"], jnp.float32).reshape(C, C))
    wstack = wf.reshape(9 * C, C)
    bias = (jnp.asarray(params["pos_b"], jnp.float32)
            + jnp.asarray(params["conv2_b"], jnp.float32)).reshape(C, 1)

    # ---- fused pad+unfold+pool + (conv2 ⊕ position 3x3) + SE + residual -----
    att = window_branch(x1, rg, wstack, bias, masks,
                        jnp.asarray(params["se_w1"], jnp.float32),
                        jnp.asarray(params["se_w2"], jnp.float32),
                        mavg, mexp, shifts=shifts)           # (N, Gw, C, Lg)

    # ---- exact torch .view(N, C*HK, nw^2) reinterpretation + F.fold ---------
    # TODO(synk): the raw-view scramble / fold layout shuffle stays as XLA
    # reshape+transpose glue (small bf16 tensors) instead of an out_spec remap.
    att_w = att.reshape(N, Gw, C, nwg, HK).transpose(0, 1, 3, 2, 4)
    att_view = att_w.reshape(N, C * HK, nw2)
    fi = att_view.reshape(N, C, h_k, w_k, nw, nw)
    if h_s == h_k and w_s == w_k:        # non-overlapping fold: pure reshape
        folded = fi.transpose(0, 1, 4, 2, 5, 3).reshape(N, C, HW)
    else:
        # TODO(synk): overlapping fold falls back to XLA scatter-add glue.
        fi32 = fi.astype(jnp.float32)
        acc = jnp.zeros((N, C, H, W), jnp.float32)
        for wy in range(nw):
            for wx in range(nw):
                acc = acc.at[:, :, wy * h_s:wy * h_s + h_k,
                             wx * w_s:wx * w_s + w_k].add(fi32[:, :, :, :, wy, wx])
        folded = acc.reshape(N, C, HW).astype(jnp.bfloat16)

    # ---- conv3 on cat([folded / count, x2]); 1/count scale fused in ---------
    out = conv3_fused(folded, x2, inv_cnt, params["conv3_w"], params["conv3_b"],
                      Mp=Mp, tm=tm)
    return out[:, :, :HW].reshape(N, C, H, W)


# -------------------------------------------------------------------- params

def make_params(in_channels, key):
    C = in_channels
    reduction = int(C ** 0.5)
    mid = C // reduction
    ks = jax.random.split(key, 10)
    nrm = lambda k, s, sc=0.1: (sc * jax.random.normal(k, s)).astype(jnp.float32)
    return {
        "conv1_w": nrm(ks[0], (2 * C, C, 1, 1)),
        "conv1_b": nrm(ks[1], (2 * C,), 0.01),
        "conv2_w": nrm(ks[2], (C, C, 1, 1)),
        "conv2_b": nrm(ks[3], (C,), 0.01),
        "conv3_w": nrm(ks[4], (C, 2 * C, 1, 1)),
        "conv3_b": nrm(ks[5], (C,), 0.01),
        "pos_w":   nrm(ks[6], (C, C, 3, 3)),
        "pos_b":   nrm(ks[7], (C,), 0.01),
        # SELayer fc weights (no bias), natural torch orientation.
        "se_w1": nrm(ks[8], (mid, C, 1, 1)).reshape(mid, C),
        "se_w2": nrm(ks[9], (C, mid, 1, 1)).reshape(C, mid),
    }


if __name__ == "__main__":
    in_channels = 4
    extension = 2
    num_windows = 4

    _buffered_ok()      # resolve pl.Buffered(1) support once, outside jit
    _vmem_limit()       # resolve per-generation VMEM budget once

    key = jax.random.PRNGKey(0)
    kx, kp = jax.random.split(key)
    x = jax.random.normal(kx, (2, in_channels, 16, 16), dtype=jnp.float32)
    params = make_params(in_channels, kp)

    fwd = jax.jit(dpconv_forward, static_argnums=(2, 3))
    out = fwd(x, params, extension, num_windows)
    jax.block_until_ready(out)
    assert out.shape == (2, in_channels, 16, 16)
    print("KERNEL_OK")
</pallas_src>

<mosaic_0001>
module attributes {stable_mosaic.version = 11 : i64} {
  func.func @_copy(%arg0: i32, %arg1: memref<8x128xf32, #tpu.memory_space<vmem>>, %arg2: memref<8x128xf32, #tpu.memory_space<vmem>>) attributes {dimension_semantics = [#tpu.dimension_semantics<arbitrary>], iteration_bounds = array<i64: 1>, scalar_prefetch = 0 : i64, scratch_operands = 0 : i64, tpu.core_type = #tpu.core_type<tc>, window_params = [{pipeline_mode = #tpu.pipeline_mode<synchronous>, transform_indices = @transform_0, window_bounds = array<i64: 8, 128>}, {pipeline_mode = #tpu.pipeline_mode<synchronous>, transform_indices = @transform_1, window_bounds = array<i64: 8, 128>}]} {
    %c0 = arith.constant 0 : index
    %c0_0 = arith.constant 0 : index
    %0 = vector.load %arg1[%c0, %c0_0] : memref<8x128xf32, #tpu.memory_space<vmem>>, vector<8x128xf32>
    %cst = arith.constant 1.000000e+00 : f32
    %1 = vector.broadcast %cst : f32 to vector<8x128xf32>
    %2 = arith.addf %0, %1 : vector<8x128xf32>
    %c0_1 = arith.constant 0 : index
    %c0_2 = arith.constant 0 : index
    %3 = vector.load %arg2[%c0_1, %c0_2] : memref<8x128xf32, #tpu.memory_space<vmem>>, vector<8x128xf32>
    tpu.vector_store %arg2[%c0_1, %c0_2], %2 {strides = array<i32>} : memref<8x128xf32, #tpu.memory_space<vmem>>, vector<8x128xf32>,
    return
  }
  func.func @transform_0(%arg0: i32) -> (i32, i32) {
    %c0_i32 = arith.constant 0 : i32
    %c0_i32_0 = arith.constant 0 : i32
    %c0_i32_1 = arith.constant 0 : i32
    return %c0_i32, %c0_i32_0 : i32, i32
  }
  func.func @transform_1(%arg0: i32) -> (i32, i32) {
    %c0_i32 = arith.constant 0 : i32
    %c0_i32_0 = arith.constant 0 : i32
    %c0_i32_1 = arith.constant 0 : i32
    return %c0_i32, %c0_i32_0 : i32, i32
  }
}

module attributes {stable_mosaic.version = 11 : i64} {
  func.func @_conv1_kernel(%arg0: i32, %arg1: i32, %arg2: memref<1x4x256xf32, #tpu.memory_space<vmem>>, %arg3: memref<8x4xf32, #tpu.memory_space<vmem>>, %arg4: memref<8x1xf32, #tpu.memory_space<vmem>>, %arg5: memref<1x4x256xbf16, #tpu.memory_space<vmem>>, %arg6: memref<1x4x256xbf16, #tpu.memory_space<vmem>>) attributes {dimension_semantics = [#tpu.dimension_semantics<parallel>, #tpu.dimension_semantics<parallel>], iteration_bounds = array<i64: 2, 1>, scalar_prefetch = 0 : i64, scratch_operands = 0 : i64, tpu.core_type = #tpu.core_type<tc>, window_params = [{transform_indices = @transform_0, window_bounds = array<i64: 1, 4, 256>}, {pipeline_mode = #tpu.pipeline_mode<synchronous>, transform_indices = @transform_1, window_bounds = array<i64: 8, 4>}, {pipeline_mode = #tpu.pipeline_mode<synchronous>, transform_indices = @transform_2, window_bounds = array<i64: 8, 1>}, {transform_indices = @transform_3, window_bounds = array<i64: 1, 4, 256>}, {transform_indices = @transform_4, window_bounds = array<i64: 1, 4, 256>}]} {
    %c0 = arith.constant 0 : index
    %c0_0 = arith.constant 0 : index
    %0 = vector.load %arg3[%c0, %c0_0] : memref<8x4xf32, #tpu.memory_space<vmem>>, vector<8x4xf32>
    %c0_1 = arith.constant 0 : index
    %c0_2 = arith.constant 0 : index
    %c0_3 = arith.constant 0 : index
    %1 = vector.load %arg2[%c0_1, %c0_2, %c0_3] : memref<1x4x256xf32, #tpu.memory_space<vmem>>, vector<1x4x256xf32>
    %2 = vector.shape_cast %1 : vector<1x4x256xf32> to vector<4x256xf32>
    %cst = arith.constant dense<0.000000e+00> : vector<8x256xf32>
    %3 = tpu.matmul %0, %2, %cst {dimension_numbers = #tpu.dot_dimension_numbers<[1], [0], [0], [1], [0, 0, 1, 1], [], []>} : vector<8x4xf32>, vector<4x256xf32>, vector<8x256xf32> -> vector<8x256xf32>
    %c0_4 = arith.constant 0 : index
    %c0_5 = arith.constant 0 : index
    %4 = vector.load %arg4[%c0_4, %c0_5] : memref<8x1xf32, #tpu.memory_space<vmem>>, vector<8x1xf32>
    %5 = vector.broadcast %4 : vector<8x1xf32> to vector<8x256xf32>
    %6 = arith.addf %3, %5 : vector<8x256xf32>
    %7 = vector.extract_strided_slice %6 {offsets = [0, 0], sizes = [4, 256], strides = [1, 1]} : vector<8x256xf32> to vector<4x256xf32>
    %8 = arith.truncf %7 : vector<4x256xf32> to vector<4x256xbf16>
    %c0_6 = arith.constant 0 : index
    %c0_7 = arith.constant 0 : index
    %c0_8 = arith.constant 0 : index
    %9 = vector.load %arg5[%c0_6, %c0_7, %c0_8] : memref<1x4x256xbf16, #tpu.memory_space<vmem>>, vector<1x4x256xbf16>
    %10 = vector.shape_cast %9 : vector<1x4x256xbf16> to vector<4x256xbf16>
    %11 = vector.shape_cast %8 : vector<4x256xbf16> to vector<1x4x256xbf16>
    tpu.vector_store %arg5[%c0_6, %c0_7, %c0_8], %11 {strides = array<i32>} : memref<1x4x256xbf16, #tpu.memory_space<vmem>>, vector<1x4x256xbf16>,
    %12 = vector.extract_strided_slice %6 {offsets = [4, 0], sizes = [4, 256], strides = [1, 1]} : vector<8x256xf32> to vector<4x256xf32>
    %13 = arith.truncf %12 : vector<4x256xf32> to vector<4x256xbf16>
    %c0_9 = arith.constant 0 : index
    %c0_10 = arith.constant 0 : index
    %c0_11 = arith.constant 0 : index
    %14 = vector.load %arg6[%c0_9, %c0_10, %c0_11] : memref<1x4x256xbf16, #tpu.memory_space<vmem>>, vector<1x4x256xbf16>
    %15 = vector.shape_cast %14 : vector<1x4x256xbf16> to vector<4x256xbf16>
    %16 = vector.shape_cast %13 : vector<4x256xbf16> to vector<1x4x256xbf16>
    tpu.vector_store %arg6[%c0_9, %c0_10, %c0_11], %16 {strides = array<i32>} : memref<1x4x256xbf16, #tpu.memory_space<vmem>>, vector<1x4x256xbf16>,
    return
  }
  func.func @transform_0(%arg0: i32, %arg1: i32) -> (i32, i32, i32) {
    %c0_i32 = arith.constant 0 : i32
    %c0_i32_0 = arith.constant 0 : i32
    return %arg0, %c0_i32, %arg1 : i32, i32, i32
  }
  func.func @transform_1(%arg0: i32, %arg1: i32) -> (i32, i32) {
    %c0_i32 = arith.constant 0 : i32
    %c0_i32_0 = arith.constant 0 : i32
    %c0_i32_1 = arith.constant 0 : i32
    return %c0_i32, %c0_i32_0 : i32, i32
  }
  func.func @transform_2(%arg0: i32, %arg1: i32) -> (i32, i32) {
    %c0_i32 = arith.constant 0 : i32
    %c0_i32_0 = arith.constant 0 : i32
    %c0_i32_1 = arith.constant 0 : i32
    return %c0_i32, %c0_i32_0 : i32, i32
  }
  func.func @transform_3(%arg0: i32, %arg1: i32) -> (i32, i32, i32) {
    %c0_i32 = arith.constant 0 : i32
    %c0_i32_0 = arith.constant 0 : i32
    return %arg0, %c0_i32, %arg1 : i32, i32, i32
  }
  func.func @transform_4(%arg0: i32, %arg1: i32) -> (i32, i32, i32) {
    %c0_i32 = arith.constant 0 : i32
    %c0_i32_0 = arith.constant 0 : i32
    return %arg0, %c0_i32, %arg1 : i32, i32, i32
  }
}

module attributes {stable_mosaic.version = 11 : i64} {
  func.func @_window_kernel(%arg0: i32, %arg1: i32, %arg2: memref<1x4x256xbf16, #tpu.memory_space<vmem>>, %arg3: memref<1x256x128xf32, #tpu.memory_space<vmem>>, %arg4: memref<36x4xf32, #tpu.memory_space<vmem>>, %arg5: memref<4x1xf32, #tpu.memory_space<vmem>>, %arg6: memref<9x128xf32, #tpu.memory_space<vmem>>, %arg7: memref<2x4xf32, #tpu.memory_space<vmem>>, %arg8: memref<4x2xf32, #tpu.memory_space<vmem>>, %arg9: memref<128x8xf32, #tpu.memory_space<vmem>>, %arg10: memref<8x128xf32, #tpu.memory_space<vmem>>, %arg11: memref<1x1x4x128xbf16, #tpu.memory_space<vmem>>) attributes {dimension_semantics = [#tpu.dimension_semantics<parallel>, #tpu.dimension_semantics<parallel>], iteration_bounds = array<i64: 2, 2>, scalar_prefetch = 0 : i64, scratch_operands = 0 : i64, tpu.core_type = #tpu.core_type<tc>, window_params = [{transform_indices = @transform_0, window_bounds = array<i64: 1, 4, 256>}, {transform_indices = @transform_1, window_bounds = array<i64: 1, 256, 128>}, {pipeline_mode = #tpu.pipeline_mode<synchronous>, transform_indices = @transform_2, window_bounds = array<i64: 36, 4>}, {pipeline_mode = #tpu.pipeline_mode<synchronous>, transform_indices = @transform_3, window_bounds = array<i64: 4, 1>}, {pipeline_mode = #tpu.pipeline_mode<synchronous>, transform_indices = @transform_4, window_bounds = array<i64: 9, 128>}, {pipeline_mode = #tpu.pipeline_mode<synchronous>, transform_indices = @transform_5, window_bounds = array<i64: 2, 4>}, {pipeline_mode = #tpu.pipeline_mode<synchronous>, transform_indices = @transform_6, window_bounds = array<i64: 4, 2>}, {pipeline_mode = #tpu.pipeline_mode<synchronous>, transform_indices = @transform_7, window_bounds = array<i64: 128, 8>}, {pipeline_mode = #tpu.pipeline_mode<synchronous>, transform_indices = @transform_8, window_bounds = array<i64: 8, 128>}, {transform_indices = @transform_9, window_bounds = array<i64: 1, 1, 4, 128>}]} {
    %c0 = arith.constant 0 : index
    %c0_0 = arith.constant 0 : index
    %c0_1 = arith.constant 0 : index
    %0 = vector.load %arg2[%c0, %c0_0, %c0_1] : memref<1x4x256xbf16, #tpu.memory_space<vmem>>, vector<1x4x256xbf16>
    %1 = vector.shape_cast %0 : vector<1x4x256xbf16> to vector<4x256xbf16>
    %2 = arith.extf %1 : vector<4x256xbf16> to vector<4x256xf32>
    %c0_2 = arith.constant 0 : index
    %c0_3 = arith.constant 0 : index
    %c0_4 = arith.constant 0 : index
    %3 = vector.load %arg3[%c0_2, %c0_3, %c0_4] : memref<1x256x128xf32, #tpu.memory_space<vmem>>, vector<1x256x128xf32>
    %4 = vector.shape_cast %3 : vector<1x256x128xf32> to vector<256x128xf32>
    %cst = arith.constant dense<0.000000e+00> : vector<4x128xf32>
    %5 = tpu.matmul %2, %4, %cst {dimension_numbers = #tpu.dot_dimension_numbers<[1], [0], [0], [1], [0, 0, 1, 1], [], []>} : vector<4x256xf32>, vector<256x128xf32>, vector<4x128xf32> -> vector<4x128xf32>
    %c0_5 = arith.constant 0 : index
    %c0_6 = arith.constant 0 : index
    %6 = vector.load %arg4[%c0_5, %c0_6] : memref<36x4xf32, #tpu.memory_space<vmem>>, vector<36x4xf32>
    %cst_7 = arith.constant dense<0.000000e+00> : vector<36x128xf32>
    %7 = tpu.matmul %6, %5, %cst_7 {dimension_numbers = #tpu.dot_dimension_numbers<[1], [0], [0], [1], [0, 0, 1, 1], [], []>} : vector<36x4xf32>, vector<4x128xf32>, vector<36x128xf32> -> vector<36x128xf32>
    %cst_8 = arith.constant 0.000000e+00 : f32
    %8 = vector.broadcast %cst_8 : f32 to vector<4x128xf32>
    %9 = vector.extract_strided_slice %7 {offsets = [0, 0], sizes = [4, 128], strides = [1, 1]} : vector<36x128xf32> to vector<4x128xf32>
    %c5_i32 = arith.constant 5 : i32
    %10 = tpu.dynamic_rotate %9 by %c5_i32 dim 1 : vector<4x128xf32>, i32 -> vector<4x128xf32>
    %c0_9 = arith.constant 0 : index
    %c0_10 = arith.constant 0 : index
    %11 = vector.load %arg6[%c0_9, %c0_10] : memref<9x128xf32, #tpu.memory_space<vmem>>, vector<1x128xf32>
    %12 = vector.broadcast %11 : vector<1x128xf32> to vector<4x128xf32>
    %13 = arith.mulf %10, %12 : vector<4x128xf32>
    %14 = arith.addf %8, %13 : vector<4x128xf32>
    %15 = vector.extract_strided_slice %7 {offsets = [4, 0], sizes = [4, 128], strides = [1, 1]} : vector<36x128xf32> to vector<4x128xf32>
    %c4_i32 = arith.constant 4 : i32
    %16 = tpu.dynamic_rotate %15 by %c4_i32 dim 1 : vector<4x128xf32>, i32 -> vector<4x128xf32>
    %c1 = arith.constant 1 : index
    %c0_11 = arith.constant 0 : index
    %17 = vector.load %arg6[%c1, %c0_11] : memref<9x128xf32, #tpu.memory_space<vmem>>, vector<1x128xf32>
    %18 = vector.broadcast %17 : vector<1x128xf32> to vector<4x128xf32>
    %19 = arith.mulf %16, %18 : vector<4x128xf32>
    %20 = arith.addf %14, %19 : vector<4x128xf32>
    %21 = vector.extract_strided_slice %7 {offsets = [8, 0], sizes = [4, 128], strides = [1, 1]} : vector<36x128xf32> to vector<4x128xf32>
    %c3_i32 = arith.constant 3 : i32
    %22 = tpu.dynamic_rotate %21 by %c3_i32 dim 1 : vector<4x128xf32>, i32 -> vector<4x128xf32>
    %c2 = arith.constant 2 : index
    %c0_12 = arith.constant 0 : index
    %23 = vector.load %arg6[%c2, %c0_12] : memref<9x128xf32, #tpu.memory_space<vmem>>, vector<1x128xf32>
    %24 = vector.broadcast %23 : vector<1x128xf32> to vector<4x128xf32>
    %25 = arith.mulf %22, %24 : vector<4x128xf32>
    %26 = arith.addf %20, %25 : vector<4x128xf32>
    %27 = vector.extract_strided_slice %7 {offsets = [12, 0], sizes = [4, 128], strides = [1, 1]} : vector<36x128xf32> to vector<4x128xf32>
    %c1_i32 = arith.constant 1 : i32
    %28 = tpu.dynamic_rotate %27 by %c1_i32 dim 1 : vector<4x128xf32>, i32 -> vector<4x128xf32>
    %c3 = arith.constant 3 : index
    %c0_13 = arith.constant 0 : index
    %29 = vector.load %arg6[%c3, %c0_13] : memref<9x128xf32, #tpu.memory_space<vmem>>, vector<1x128xf32>
    %30 = vector.broadcast %29 : vector<1x128xf32> to vector<4x128xf32>
    %31 = arith.mulf %28, %30 : vector<4x128xf32>
    %32 = arith.addf %26, %31 : vector<4x128xf32>
    %33 = vector.extract_strided_slice %7 {offsets = [16, 0], sizes = [4, 128], strides = [1, 1]} : vector<36x128xf32> to vector<4x128xf32>
    %c4 = arith.constant 4 : index
    %c0_14 = arith.constant 0 : index
    %34 = vector.load %arg6[%c4, %c0_14] : memref<9x128xf32, #tpu.memory_space<vmem>>, vector<1x128xf32>
    %35 = vector.broadcast %34 : vector<1x128xf32> to vector<4x128xf32>
    %36 = arith.mulf %33, %35 : vector<4x128xf32>
    %37 = arith.addf %32, %36 : vector<4x128xf32>
    %38 = vector.extract_strided_slice %7 {offsets = [20, 0], sizes = [4, 128], strides = [1, 1]} : vector<36x128xf32> to vector<4x128xf32>
    %c127_i32 = arith.constant 127 : i32
    %39 = tpu.dynamic_rotate %38 by %c127_i32 dim 1 : vector<4x128xf32>, i32 -> vector<4x128xf32>
    %c5 = arith.constant 5 : index
    %c0_15 = arith.constant 0 : index
    %40 = vector.load %arg6[%c5, %c0_15] : memref<9x128xf32, #tpu.memory_space<vmem>>, vector<1x128xf32>
    %41 = vector.broadcast %40 : vector<1x128xf32> to vector<4x128xf32>
    %42 = arith.mulf %39, %41 : vector<4x128xf32>
    %43 = arith.addf %37, %42 : vector<4x128xf32>
    %44 = vector.extract_strided_slice %7 {offsets = [24, 0], sizes = [4, 128], strides = [1, 1]} : vector<36x128xf32> to vector<4x128xf32>
    %c125_i32 = arith.constant 125 : i32
    %45 = tpu.dynamic_rotate %44 by %c125_i32 dim 1 : vector<4x128xf32>, i32 -> vector<4x128xf32>
    %c6 = arith.constant 6 : index
    %c0_16 = arith.constant 0 : index
    %46 = vector.load %arg6[%c6, %c0_16] : memref<9x128xf32, #tpu.memory_space<vmem>>, vector<1x128xf32>
    %47 = vector.broadcast %46 : vector<1x128xf32> to vector<4x128xf32>
    %48 = arith.mulf %45, %47 : vector<4x128xf32>
    %49 = arith.addf %43, %48 : vector<4x128xf32>
    %50 = vector.extract_strided_slice %7 {offsets = [28, 0], sizes = [4, 128], strides = [1, 1]} : vector<36x128xf32> to vector<4x128xf32>
    %c124_i32 = arith.constant 124 : i32
    %51 = tpu.dynamic_rotate %50 by %c124_i32 dim 1 : vector<4x128xf32>, i32 -> vector<4x128xf32>
    %c7 = arith.constant 7 : index
    %c0_17 = arith.constant 0 : index
    %52 = vector.load %arg6[%c7, %c0_17] : memref<9x128xf32, #tpu.memory_space<vmem>>, vector<1x128xf32>
    %53 = vector.broadcast %52 : vector<1x128xf32> to vector<4x128xf32>
    %54 = arith.mulf %51, %53 : vector<4x128xf32>
    %55 = arith.addf %49, %54 : vector<4x128xf32>
    %56 = vector.extract_strided_slice %7 {offsets = [32, 0], sizes = [4, 128], strides = [1, 1]} : vector<36x128xf32> to vector<4x128xf32>
    %c123_i32 = arith.constant 123 : i32
    %57 = tpu.dynamic_rotate %56 by %c123_i32 dim 1 : vector<4x128xf32>, i32 -> vector<4x128xf32>
    %c8 = arith.constant 8 : index
    %c0_18 = arith.constant 0 : index
    %58 = vector.load %arg6[%c8, %c0_18] : memref<9x128xf32, #tpu.memory_space<vmem>>, vector<1x128xf32>
    %59 = vector.broadcast %58 : vector<1x128xf32> to vector<4x128xf32>
    %60 = arith.mulf %57, %59 : vector<4x128xf32>
    %61 = arith.addf %55, %60 : vector<4x128xf32>
    %c0_19 = arith.constant 0 : index
    %c0_20 = arith.constant 0 : index
    %62 = vector.load %arg5[%c0_19, %c0_20] : memref<4x1xf32, #tpu.memory_space<vmem>>, vector<4x1xf32>
    %63 = vector.broadcast %62 : vector<4x1xf32> to vector<4x128xf32>
    %64 = arith.addf %61, %63 : vector<4x128xf32>
    %c0_21 = arith.constant 0 : index
    %c0_22 = arith.constant 0 : index
    %65 = vector.load %arg9[%c0_21, %c0_22] : memref<128x8xf32, #tpu.memory_space<vmem>>, vector<128x8xf32>
    %cst_23 = arith.constant dense<0.000000e+00> : vector<4x8xf32>
    %66 = tpu.matmul %64, %65, %cst_23 {dimension_numbers = #tpu.dot_dimension_numbers<[1], [0], [0], [1], [0, 0, 1, 1], [], []>} : vector<4x128xf32>, vector<128x8xf32>, vector<4x8xf32> -> vector<4x8xf32>
    %c0_24 = arith.constant 0 : index
    %c0_25 = arith.constant 0 : index
    %67 = vector.load %arg7[%c0_24, %c0_25] : memref<2x4xf32, #tpu.memory_space<vmem>>, vector<2x4xf32>
    %cst_26 = arith.constant dense<0.000000e+00> : vector<2x8xf32>
    %68 = tpu.matmul %67, %66, %cst_26 {dimension_numbers = #tpu.dot_dimension_numbers<[1], [0], [0], [1], [0, 0, 1, 1], [], []>} : vector<2x4xf32>, vector<4x8xf32>, vector<2x8xf32> -> vector<2x8xf32>
    %cst_27 = arith.constant 0.000000e+00 : f32
    %69 = vector.broadcast %cst_27 : f32 to vector<2x8xf32>
    %70 = arith.maximumf %68, %69 : vector<2x8xf32>
    %c0_28 = arith.constant 0 : index
    %c0_29 = arith.constant 0 : index
    %71 = vector.load %arg8[%c0_28, %c0_29] : memref<4x2xf32, #tpu.memory_space<vmem>>, vector<4x2xf32>
    %cst_30 = arith.constant dense<0.000000e+00> : vector<4x8xf32>
    %72 = tpu.matmul %71, %70, %cst_30 {dimension_numbers = #tpu.dot_dimension_numbers<[1], [0], [0], [1], [0, 0, 1, 1], [], []>} : vector<4x2xf32>, vector<2x8xf32>, vector<4x8xf32> -> vector<4x8xf32>
    %cst_31 = arith.constant 0.000000e+00 : f32
    %73 = vector.broadcast %cst_31 : f32 to vector<4x8xf32>
    %74 = arith.subf %73, %72 : vector<4x8xf32>
    %75 = math.exp %74 : vector<4x8xf32>
    %cst_32 = arith.constant 1.000000e+00 : f32
    %76 = vector.broadcast %cst_32 : f32 to vector<4x8xf32>
    %77 = arith.addf %76, %75 : vector<4x8xf32>
    %cst_33 = arith.constant 1.000000e+00 : f32
    %78 = vector.broadcast %cst_33 : f32 to vector<4x8xf32>
    %79 = arith.divf %78, %77 : vector<4x8xf32>
    %cst_34 = arith.constant 1.000000e+00 : f32
    %80 = vector.broadcast %cst_34 : f32 to vector<4x8xf32>
    %81 = arith.addf %79, %80 : vector<4x8xf32>
    %c0_35 = arith.constant 0 : index
    %c0_36 = arith.constant 0 : index
    %82 = vector.load %arg10[%c0_35, %c0_36] : memref<8x128xf32, #tpu.memory_space<vmem>>, vector<8x128xf32>
    %cst_37 = arith.constant dense<0.000000e+00> : vector<4x128xf32>
    %83 = tpu.matmul %81, %82, %cst_37 {dimension_numbers = #tpu.dot_dimension_numbers<[1], [0], [0], [1], [0, 0, 1, 1], [], []>} : vector<4x8xf32>, vector<8x128xf32>, vector<4x128xf32> -> vector<4x128xf32>
    %84 = arith.mulf %64, %83 : vector<4x128xf32>
    %85 = arith.truncf %84 : vector<4x128xf32> to vector<4x128xbf16>
    %c0_38 = arith.constant 0 : index
    %c0_39 = arith.constant 0 : index
    %c0_40 = arith.constant 0 : index
    %c0_41 = arith.constant 0 : index
    %86 = vector.load %arg11[%c0_38, %c0_39, %c0_40, %c0_41] : memref<1x1x4x128xbf16, #tpu.memory_space<vmem>>, vector<1x1x4x128xbf16>
    %87 = vector.shape_cast %86 : vector<1x1x4x128xbf16> to vector<4x128xbf16>
    %88 = vector.shape_cast %85 : vector<4x128xbf16> to vector<1x1x4x128xbf16>
    tpu.vector_store %arg11[%c0_38, %c0_39, %c0_40, %c0_41], %88 {strides = array<i32>} : memref<1x1x4x128xbf16, #tpu.memory_space<vmem>>, vector<1x1x4x128xbf16>,
    return
  }
  func.func @transform_0(%arg0: i32, %arg1: i32) -> (i32, i32, i32) {
    %c0_i32 = arith.constant 0 : i32
    %c0_i32_0 = arith.constant 0 : i32
    %c0_i32_1 = arith.constant 0 : i32
    return %arg0, %c0_i32, %c0_i32_0 : i32, i32, i32
  }
  func.func @transform_1(%arg0: i32, %arg1: i32) -> (i32, i32, i32) {
    %c0_i32 = arith.constant 0 : i32
    %c0_i32_0 = arith.constant 0 : i32
    %c0_i32_1 = arith.constant 0 : i32
    return %arg1, %c0_i32, %c0_i32_0 : i32, i32, i32
  }
  func.func @transform_2(%arg0: i32, %arg1: i32) -> (i32, i32) {
    %c0_i32 = arith.constant 0 : i32
    %c0_i32_0 = arith.constant 0 : i32
    %c0_i32_1 = arith.constant 0 : i32
    return %c0_i32, %c0_i32_0 : i32, i32
  }
  func.func @transform_3(%arg0: i32, %arg1: i32) -> (i32, i32) {
    %c0_i32 = arith.constant 0 : i32
    %c0_i32_0 = arith.constant 0 : i32
    %c0_i32_1 = arith.constant 0 : i32
    return %c0_i32, %c0_i32_0 : i32, i32
  }
  func.func @transform_4(%arg0: i32, %arg1: i32) -> (i32, i32) {
    %c0_i32 = arith.constant 0 : i32
    %c0_i32_0 = arith.constant 0 : i32
    %c0_i32_1 = arith.constant 0 : i32
    return %c0_i32, %c0_i32_0 : i32, i32
  }
  func.func @transform_5(%arg0: i32, %arg1: i32) -> (i32, i32) {
    %c0_i32 = arith.constant 0 : i32
    %c0_i32_0 = arith.constant 0 : i32
    %c0_i32_1 = arith.constant 0 : i32
    return %c0_i32, %c0_i32_0 : i32, i32
  }
  func.func @transform_6(%arg0: i32, %arg1: i32) -> (i32, i32) {
    %c0_i32 = arith.constant 0 : i32
    %c0_i32_0 = arith.constant 0 : i32
    %c0_i32_1 = arith.constant 0 : i32
    return %c0_i32, %c0_i32_0 : i32, i32
  }
  func.func @transform_7(%arg0: i32, %arg1: i32) -> (i32, i32) {
    %c0_i32 = arith.constant 0 : i32
    %c0_i32_0 = arith.constant 0 : i32
    %c0_i32_1 = arith.constant 0 : i32
    return %c0_i32, %c0_i32_0 : i32, i32
  }
  func.func @transform_8(%arg0: i32, %arg1: i32) -> (i32, i32) {
    %c0_i32 = arith.constant 0 : i32
    %c0_i32_0 = arith.constant 0 : i32
    %c0_i32_1 = arith.constant 0 : i32
    return %c0_i32, %c0_i32_0 : i32, i32
  }
  func.func @transform_9(%arg0: i32, %arg1: i32) -> (i32, i32, i32, i32) {
    %c0_i32 = arith.constant 0 : i32
    %c0_i32_0 = arith.constant 0 : i32
    %c0_i32_1 = arith.constant 0 : i32
    return %arg0, %arg1, %c0_i32, %c0_i32_0 : i32, i32, i32, i32
  }
}

module attributes {stable_mosaic.version = 11 : i64} {
  func.func @_conv3_kernel(%arg0: i32, %arg1: i32, %arg2: memref<1x4x256xbf16, #tpu.memory_space<vmem>>, %arg3: memref<1x4x256xbf16, #tpu.memory_space<vmem>>, %arg4: memref<1x256xf32, #tpu.memory_space<vmem>>, %arg5: memref<4x4xbf16, #tpu.memory_space<vmem>>, %arg6: memref<4x4xbf16, #tpu.memory_space<vmem>>, %arg7: memref<4x1xf32, #tpu.memory_space<vmem>>, %arg8: memref<1x4x256xf32, #tpu.memory_space<vmem>>) attributes {dimension_semantics = [#tpu.dimension_semantics<parallel>, #tpu.dimension_semantics<parallel>], iteration_bounds = array<i64: 2, 1>, scalar_prefetch = 0 : i64, scratch_operands = 0 : i64, tpu.core_type = #tpu.core_type<tc>, window_params = [{transform_indices = @transform_0, window_bounds = array<i64: 1, 4, 256>}, {transform_indices = @transform_1, window_bounds = array<i64: 1, 4, 256>}, {transform_indices = @transform_2, window_bounds = array<i64: 1, 256>}, {pipeline_mode = #tpu.pipeline_mode<synchronous>, transform_indices = @transform_3, window_bounds = array<i64: 4, 4>}, {pipeline_mode = #tpu.pipeline_mode<synchronous>, transform_indices = @transform_4, window_bounds = array<i64: 4, 4>}, {pipeline_mode = #tpu.pipeline_mode<synchronous>, transform_indices = @transform_5, window_bounds = array<i64: 4, 1>}, {transform_indices = @transform_6, window_bounds = array<i64: 1, 4, 256>}]} {
    %c0 = arith.constant 0 : index
    %c0_0 = arith.constant 0 : index
    %0 = vector.load %arg5[%c0, %c0_0] : memref<4x4xbf16, #tpu.memory_space<vmem>>, vector<4x4xbf16>
    %c0_1 = arith.constant 0 : index
    %c0_2 = arith.constant 0 : index
    %c0_3 = arith.constant 0 : index
    %1 = vector.load %arg2[%c0_1, %c0_2, %c0_3] : memref<1x4x256xbf16, #tpu.memory_space<vmem>>, vector<1x4x256xbf16>
    %2 = vector.shape_cast %1 : vector<1x4x256xbf16> to vector<4x256xbf16>
    %cst = arith.constant dense<0.000000e+00> : vector<4x256xf32>
    %3 = tpu.matmul %0, %2, %cst {dimension_numbers = #tpu.dot_dimension_numbers<[1], [0], [0], [1], [0, 0, 1, 1], [], []>} : vector<4x4xbf16>, vector<4x256xbf16>, vector<4x256xf32> -> vector<4x256xf32>
    %c0_4 = arith.constant 0 : index
    %c0_5 = arith.constant 0 : index
    %4 = vector.load %arg4[%c0_4, %c0_5] : memref<1x256xf32, #tpu.memory_space<vmem>>, vector<1x256xf32>
    %5 = vector.broadcast %4 : vector<1x256xf32> to vector<4x256xf32>
    %6 = arith.mulf %3, %5 : vector<4x256xf32>
    %c0_6 = arith.constant 0 : index
    %c0_7 = arith.constant 0 : index
    %7 = vector.load %arg6[%c0_6, %c0_7] : memref<4x4xbf16, #tpu.memory_space<vmem>>, vector<4x4xbf16>
    %c0_8 = arith.constant 0 : index
    %c0_9 = arith.constant 0 : index
    %c0_10 = arith.constant 0 : index
    %8 = vector.load %arg3[%c0_8, %c0_9, %c0_10] : memref<1x4x256xbf16, #tpu.memory_space<vmem>>, vector<1x4x256xbf16>
    %9 = vector.shape_cast %8 : vector<1x4x256xbf16> to vector<4x256xbf16>
    %cst_11 = arith.constant dense<0.000000e+00> : vector<4x256xf32>
    %10 = tpu.matmul %7, %9, %cst_11 {dimension_numbers = #tpu.dot_dimension_numbers<[1], [0], [0], [1], [0, 0, 1, 1], [], []>} : vector<4x4xbf16>, vector<4x256xbf16>, vector<4x256xf32> -> vector<4x256xf32>
    %11 = arith.addf %6, %10 : vector<4x256xf32>
    %c0_12 = arith.constant 0 : index
    %c0_13 = arith.constant 0 : index
    %12 = vector.load %arg7[%c0_12, %c0_13] : memref<4x1xf32, #tpu.memory_space<vmem>>, vector<4x1xf32>
    %13 = vector.broadcast %12 : vector<4x1xf32> to vector<4x256xf32>
    %14 = arith.addf %11, %13 : vector<4x256xf32>
    %c0_14 = arith.constant 0 : index
    %c0_15 = arith.constant 0 : index
    %c0_16 = arith.constant 0 : index
    %15 = vector.load %arg8[%c0_14, %c0_15, %c0_16] : memref<1x4x256xf32, #tpu.memory_space<vmem>>, vector<1x4x256xf32>
    %16 = vector.shape_cast %15 : vector<1x4x256xf32> to vector<4x256xf32>
    %17 = vector.shape_cast %14 : vector<4x256xf32> to vector<1x4x256xf32>
    tpu.vector_store %arg8[%c0_14, %c0_15, %c0_16], %17 {strides = array<i32>} : memref<1x4x256xf32, #tpu.memory_space<vmem>>, vector<1x4x256xf32>,
    return
  }
  func.func @transform_0(%arg0: i32, %arg1: i32) -> (i32, i32, i32) {
    %c0_i32 = arith.constant 0 : i32
    %c0_i32_0 = arith.constant 0 : i32
    return %arg0, %c0_i32, %arg1 : i32, i32, i32
  }
  func.func @transform_1(%arg0: i32, %arg1: i32) -> (i32, i32, i32) {
    %c0_i32 = arith.constant 0 : i32
    %c0_i32_0 = arith.constant 0 : i32
    return %arg0, %c0_i32, %arg1 : i32, i32, i32
  }
  func.func @transform_2(%arg0: i32, %arg1: i32) -> (i32, i32) {
    %c0_i32 = arith.constant 0 : i32
    %c0_i32_0 = arith.constant 0 : i32
    return %c0_i32, %arg1 : i32, i32
  }
  func.func @transform_3(%arg0: i32, %arg1: i32) -> (i32, i32) {
    %c0_i32 = arith.constant 0 : i32
    %c0_i32_0 = arith.constant 0 : i32
    %c0_i32_1 = arith.constant 0 : i32
    return %c0_i32, %c0_i32_0 : i32, i32
  }
  func.func @transform_4(%arg0: i32, %arg1: i32) -> (i32, i32) {
    %c0_i32 = arith.constant 0 : i32
    %c0_i32_0 = arith.constant 0 : i32
    %c0_i32_1 = arith.constant 0 : i32
    return %c0_i32, %c0_i32_0 : i32, i32
  }
  func.func @transform_5(%arg0: i32, %arg1: i32) -> (i32, i32) {
    %c0_i32 = arith.constant 0 : i32
    %c0_i32_0 = arith.constant 0 : i32
    %c0_i32_1 = arith.constant 0 : i32
    return %c0_i32, %c0_i32_0 : i32, i32
  }
  func.func @transform_6(%arg0: i32, %arg1: i32) -> (i32, i32, i32) {
    %c0_i32 = arith.constant 0 : i32
    %c0_i32_0 = arith.constant 0 : i32
    return %arg0, %c0_i32, %arg1 : i32, i32, i32
  }
}

</mosaic_0001>

<llo_original>
// kernel: tpu_custom_call.1
$region0: #{tpu_custom_call.1}
  #allocation0 [shape = 'u32[]', space=smem, size = 0x4, offset = 0x4, fixed_abs, tag = 'smem constant byte address 0x4 - core index']
  #allocation1 [shape = 'u32[144,128]{1,0:T(1,128)}', space=vmem, size = 0x12000, scoped, tag = 'internal scratch']
  %s0 = inlined_call_operand.hbm [shape: f32[8,128], index: 0, kind: input, shape index: {}]
  %s1 = inlined_call_operand.hbm [shape: f32[8,128], index: 1, kind: output, shape index: {}]
  %s2 = sld [smem:[#allocation0]]
  $region18: #{tpu_custom_call.1} parent=0
    _
  %s4 = ssub.s32 1, %s2
  %s5 = scalar_select 0, %s4, %s2
  $region1: #{tpu_custom_call.1} parent=0
    #allocation2 [shape = 'u8[4096]{0}', space=vmem, size = 0x1000, scoped, tag = 'input window, operand 0, single buffered']
    #allocation3 [shape = 's32[1]{0}', space=sflag, size = 0x4, scoped, tag = 'scoped memory for tpu_custom_call.1']
    #allocation4 [shape = 's32[1]{0}', space=sflag, size = 0x4, scoped, tag = 'scoped memory for tpu_custom_call.1']
    #allocation5 [shape = 'u8[4096]{0}', space=vmem, size = 0x1000, scoped, tag = 'output window, operand 0, single buffered']
    %6 = vsyncpa [#allocation3], 0
    %7 = vsyncpa [#allocation4], 0
    // Predicated region
    $region2: #{tpu_custom_call.1} parent=1 // pred_check
      _
    $region3: #{tpu_custom_call.1} parent=1 // pred_check_branch
      %9 = sbr.rel (0) target = $region5
    $region4: #{tpu_custom_call.1} parent=1 // pred_region
      %s11 = ssub.s32 128, 128
      %12 = vsyncadd [#allocation3], %s11
      %s14 = sshll.u32 [#allocation2], 4
      %s15 = int_to_ptr.vmem [resolvable:$true] %s14
      %17 = dma.hbm_to_vmem [thread:$0]  %s0, 128, %s15, [#allocation3]
    $region5: #{tpu_custom_call.1} parent=1 // pred_fallthru
      _
    // Predicated region
    $region6: #{tpu_custom_call.1} parent=1 // pred_check
      _
    $region7: #{tpu_custom_call.1} parent=1 // pred_check_branch
      %19 = sbr.rel (0) target = $region9
    $region8: #{tpu_custom_call.1} parent=1 // pred_region
      %20 = dma.done [#allocation3], 128
    $region9: #{tpu_custom_call.1} parent=1 // pred_fallthru
      _
    %v21 = vld [vmem:[#allocation2] sm:$0xff]
    %v22 = vadd.f32 %v21, 1.0
    %23 = vst [vmem:[#allocation5] sm:$0xff] %v22
    // Predicated region
    $region10: #{tpu_custom_call.1} parent=1 // pred_check
      _
    $region11: #{tpu_custom_call.1} parent=1 // pred_check_branch
      %25 = sbr.rel (0) target = $region13
    $region12: #{tpu_custom_call.1} parent=1 // pred_region
      %s27 = ssub.s32 128, 128
      %28 = vsyncadd [#allocation4], %s27
      %s30 = sshll.u32 [#allocation5], 4
      %s31 = int_to_ptr.vmem [resolvable:$true] %s30
      %33 = dma.vmem_to_hbm [thread:$0]  %s31, 128, %s1, [#allocation4]
    $region13: #{tpu_custom_call.1} parent=1 // pred_fallthru
      _
    // Predicated region
    $region14: #{tpu_custom_call.1} parent=1 // pred_check
      _
    $region15: #{tpu_custom_call.1} parent=1 // pred_check_branch
      %35 = sbr.rel (0) target = $region17
    $region16: #{tpu_custom_call.1} parent=1 // pred_region
      %36 = dma.done [#allocation4], 128
    $region17: #{tpu_custom_call.1} parent=1 // pred_fallthru
      _
    %37 = vsyncpa [#allocation3], 1
    %38 = vsyncpa [#allocation4], 1

// kernel: dpconv_forward.3
$region0: #{dpconv_forward.3}
  #allocation0 [shape = 'u32[]', space=smem, size = 0x4, offset = 0x4, fixed_abs, tag = 'smem constant byte address 0x4 - core index']
  #allocation1 [shape = 'u32[144,128]{1,0:T(1,128)}', space=vmem, size = 0x12000, scoped, tag = 'internal scratch']
  %s0 = inlined_call_operand.vmem [shape: f32[2,4,256], index: 0, kind: input, shape index: {}]
  %s1 = inlined_call_operand.vmem [shape: f32[8,4], index: 1, kind: input, shape index: {}]
  %s2 = inlined_call_operand.vmem [shape: f32[8,1], index: 2, kind: input, shape index: {}]
  %s3 = inlined_call_operand.vmem [shape: bf16[2,4,256], index: 3, kind: output, shape index: {0}]
  %s4 = inlined_call_operand.vmem [shape: bf16[2,4,256], index: 4, kind: output, shape index: {1}]
  %5 = xla_tuple %s3, %s4
  %s6 = sld [smem:[#allocation0]]
  $region53: #{dpconv_forward.3} parent=0
    _
  %s8 = ssub.s32 1, %s6
  %s9 = scalar_select 0, %s8, %s6
  loop: start=0, step=1, limit=4
  $region2: #{dpconv_forward.3} parent=0 // loop_pre_header
    _
  $region3: #{dpconv_forward.3} parent=0 // loop_header
    %s11 = sphi 0, %s15
    %p12 = scmp.ge.s32.totalorder %s11, 4
    %s18 = sphi 0, %s30
    %s19 = sphi 0, %s26
    %s20 = sphi 0, %s18
    %s21 = sphi 0, %s19
    %s22 = sphi 0, %s20
    %s23 = sphi 0, %s21
    %s35 = sphi 0, %s37
    %s38 = sphi 0, %s35
    %s39 = sphi 0, %s38
    %s55 = sphi 0, %s39
    %s59 = sphi 0, %s59
    %s61 = sphi 0, %s59
    %s62 = sphi 0, %s61
    %s76 = sphi 0, %s62
    %s80 = sphi 0, %s80
    %s82 = sphi 0, %s80
    %s83 = sphi 0, %s82
    %s97 = sphi 0, %s83
    %s105 = sphi 0, %s107
    %s108 = sphi 0, %s105
    %s109 = sphi 0, %s108
    %s125 = sphi 0, %s109
    %s133 = sphi 0, %s135
    %s136 = sphi 0, %s133
    %s137 = sphi 0, %s136
    %s153 = sphi 0, %s137
  $region4: #{dpconv_forward.3} parent=0 // loop_header_branch
    %14 = sbr.rel (%p12) target = $region8
  $region5: #{dpconv_forward.3} parent=0 // loop_body
    %s16 = ssub.s32 %s11, 1
    %s17 = ssub.s32 %s11, 2
    %s24 = sadd.s32 1, %s19
    %p25 = scmp.ge.s32.totalorder %s24, 1
    %s26 = scalar_select %p25, 0, %s24
    %s27 = sadd.s32 1, %s18
    %s28 = scalar_select %p25, %s27, %s18
    %p29 = scmp.ge.s32.totalorder %s28, 2
    %s30 = scalar_select %p29, 0, %s28
    %s31 = ssub.s32 %s18, %s30
    %s32 = ssub.s32 %s19, %s26
    %s33 = sor.u32 %s31, %s32
    %p34 = scmp.eq.s32.totalorder %s33, 0
    %s36 = sadd.s32 %s35, 1
    %s37 = scalar_select %p34, %s35, %s36
    %p40 = pneg %p34
    %p41 = scmp.eq.s32.totalorder %s11, 1
    %p42 = por %p40, %p41
    %p43 = scmp.ne.s32.totalorder %s35, %s38
    %p44 = scmp.eq.s32.totalorder %s11, 0
    %p45 = por %p43, %p44
    %p46 = scmp.ne.s32.totalorder %s35, %s38
    %p47 = scmp.eq.s32.totalorder %s16, 1
    %p48 = por %p46, %p47
    %p49 = scmp.ne.s32.totalorder %s38, %s39
    %p50 = scmp.eq.s32.totalorder %s16, 0
    %p51 = por %p49, %p50
    %p52 = scmp.ne.s32.totalorder %s38, %s39
    %p53 = scmp.eq.s32.totalorder %s17, 1
    %p54 = por %p52, %p53
    %p56 = scmp.ne.s32.totalorder %s39, %s55
    %p57 = scmp.eq.s32.totalorder %s17, 0
    %p58 = por %p56, %p57
    %s60 = sadd.s32 %s59, 1
    %p63 = scmp.eq.s32.totalorder %s11, 1
    %p64 = scmp.ne.s32.totalorder %s59, %s61
    %p65 = scmp.eq.s32.totalorder %s11, 0
    %p66 = por %p64, %p65
    %p67 = scmp.ne.s32.totalorder %s59, %s61
    %p68 = scmp.eq.s32.totalorder %s16, 1
    %p69 = por %p67, %p68
    %p70 = scmp.ne.s32.totalorder %s61, %s62
    %p71 = scmp.eq.s32.totalorder %s16, 0
    %p72 = por %p70, %p71
    %p73 = scmp.ne.s32.totalorder %s61, %s62
    %p74 = scmp.eq.s32.totalorder %s17, 1
    %p75 = por %p73, %p74
    %p77 = scmp.ne.s32.totalorder %s62, %s76
    %p78 = scmp.eq.s32.totalorder %s17, 0
    %p79 = por %p77, %p78
    %s81 = sadd.s32 %s80, 1
    %p84 = scmp.eq.s32.totalorder %s11, 1
    %p85 = scmp.ne.s32.totalorder %s80, %s82
    %p86 = scmp.eq.s32.totalorder %s11, 0
    %p87 = por %p85, %p86
    %p88 = scmp.ne.s32.totalorder %s80, %s82
    %p89 = scmp.eq.s32.totalorder %s16, 1
    %p90 = por %p88, %p89
    %p91 = scmp.ne.s32.totalorder %s82, %s83
    %p92 = scmp.eq.s32.totalorder %s16, 0
    %p93 = por %p91, %p92
    %p94 = scmp.ne.s32.totalorder %s82, %s83
    %p95 = scmp.eq.s32.totalorder %s17, 1
    %p96 = por %p94, %p95
    %p98 = scmp.ne.s32.totalorder %s83, %s97
    %p99 = scmp.eq.s32.totalorder %s17, 0
    %p100 = por %p98, %p99
    %s101 = ssub.s32 %s18, %s30
    %s102 = ssub.s32 %s19, %s26
    %s103 = sor.u32 %s101, %s102
    %p104 = scmp.eq.s32.totalorder %s103, 0
    %s106 = sadd.s32 %s105, 1
    %s107 = scalar_select %p104, %s105, %s106
    %p110 = pneg %p104
    %p111 = scmp.eq.s32.totalorder %s11, 1
    %p112 = por %p110, %p111
    %p113 = scmp.ne.s32.totalorder %s105, %s108
    %p114 = scmp.eq.s32.totalorder %s11, 0
    %p115 = por %p113, %p114
    %p116 = scmp.ne.s32.totalorder %s105, %s108
    %p117 = scmp.eq.s32.totalorder %s16, 1
    %p118 = por %p116, %p117
    %p119 = scmp.ne.s32.totalorder %s108, %s109
    %p120 = scmp.eq.s32.totalorder %s16, 0
    %p121 = por %p119, %p120
    %p122 = scmp.ne.s32.totalorder %s108, %s109
    %p123 = scmp.eq.s32.totalorder %s17, 1
    %p124 = por %p122, %p123
    %p126 = scmp.ne.s32.totalorder %s109, %s125
    %p127 = scmp.eq.s32.totalorder %s17, 0
    %p128 = por %p126, %p127
    %s129 = ssub.s32 %s18, %s30
    %s130 = ssub.s32 %s19, %s26
    %s131 = sor.u32 %s129, %s130
    %p132 = scmp.eq.s32.totalorder %s131, 0
    %s134 = sadd.s32 %s133, 1
    %s135 = scalar_select %p132, %s133, %s134
    %p138 = pneg %p132
    %p139 = scmp.eq.s32.totalorder %s11, 1
    %p140 = por %p138, %p139
    %p141 = scmp.ne.s32.totalorder %s133, %s136
    %p142 = scmp.eq.s32.totalorder %s11, 0
    %p143 = por %p141, %p142
    %p144 = scmp.ne.s32.totalorder %s133, %s136
    %p145 = scmp.eq.s32.totalorder %s16, 1
    %p146 = por %p144, %p145
    %p147 = scmp.ne.s32.totalorder %s136, %s137
    %p148 = scmp.eq.s32.totalorder %s16, 0
    %p149 = por %p147, %p148
    %p150 = scmp.ne.s32.totalorder %s136, %s137
    %p151 = scmp.eq.s32.totalorder %s17, 1
    %p152 = por %p150, %p151
    %p154 = scmp.ne.s32.totalorder %s137, %s153
    %p155 = scmp.eq.s32.totalorder %s17, 0
    %p156 = por %p154, %p155
    %p157 = scmp.le.s32.totalorder 1, %s11
    %p158 = scmp.lt.s32.totalorder %s11, 3
    %p159 = pnand %p157, %p158
    %p160 = pneg %p159
    // Predicated region
    $region9: #{dpconv_forward.3} parent=5 // pred_check
      _
    $region10: #{dpconv_forward.3} parent=5 // pred_check_branch
      %162 = sbr.rel (%p159) target = $region12
    $region11: #{dpconv_forward.3} parent=5 // pred_region
      %s163 = ssub.s32 %s11, 1
      // Predicated region
      $region13: #{dpconv_forward.3} parent=11 // pred_check
        %p164 = pneg %p72
      $region14: #{dpconv_forward.3} parent=11 // pred_check_branch
        %166 = sbr.rel (%p164) target = $region16
      $region15: #{dpconv_forward.3} parent=11 // pred_region
        _
      $region16: #{dpconv_forward.3} parent=11 // pred_fallthru
        _
      // Predicated region
      $region17: #{dpconv_forward.3} parent=11 // pred_check
        %p167 = pneg %p93
      $region18: #{dpconv_forward.3} parent=11 // pred_check_branch
        %169 = sbr.rel (%p167) target = $region20
      $region19: #{dpconv_forward.3} parent=11 // pred_region
        _
      $region20: #{dpconv_forward.3} parent=11 // pred_fallthru
        _
    $region12: #{dpconv_forward.3} parent=5 // pred_fallthru
      _
    %p170 = scmp.lt.s32.totalorder %s11, 2
    // Predicated region
    $region21: #{dpconv_forward.3} parent=5 // pred_check
      %p171 = pneg %p170
    $region22: #{dpconv_forward.3} parent=5 // pred_check_branch
      %173 = sbr.rel (%p171) target = $region24
    $region23: #{dpconv_forward.3} parent=5 // pred_region
      // Predicated region
      $region25: #{dpconv_forward.3} parent=23 // pred_check
        %p174 = pneg %p45
      $region26: #{dpconv_forward.3} parent=23 // pred_check_branch
        %176 = sbr.rel (%p174) target = $region28
      $region27: #{dpconv_forward.3} parent=23 // pred_region
        %s177 = smul.u32 2, %s19
        %p178 = scmp.lt.s32.totalorder %s18, 1
        %s179 = scalar_select %p178, %s18, 1
        %p180 = scmp.lt.s32.totalorder %s177, 1
        %s181 = scalar_select %p180, %s177, 1
        %s182 = smul.addr %s179, 2
        %s183 = sadd.s32 %s181, %s182
        %s184 = smul.addr %s183, 4
        %s185 = scalar_lea.vmem %s0, %s184
        %s186 = smul.u32 2, %s19
      $region28: #{dpconv_forward.3} parent=23 // pred_fallthru
        _
    $region24: #{dpconv_forward.3} parent=5 // pred_fallthru
      _
    %p187 = scmp.le.s32.totalorder 1, %s11
    %p188 = scmp.lt.s32.totalorder %s11, 3
    %p189 = pnand %p187, %p188
    %p190 = pneg %p189
    // Predicated region
    $region29: #{dpconv_forward.3} parent=5 // pred_check
      _
    $region30: #{dpconv_forward.3} parent=5 // pred_check_branch
      %192 = sbr.rel (%p189) target = $region32
    $region31: #{dpconv_forward.3} parent=5 // pred_region
      %s193 = ssub.s32 %s11, 1
      %s194 = smul.u32 2, %s21
      %p195 = scmp.lt.s32.totalorder %s20, 1
      %s196 = scalar_select %p195, %s20, 1
      %p197 = scmp.lt.s32.totalorder %s194, 1
      %s198 = scalar_select %p197, %s194, 1
      %s199 = smul.addr %s196, 2
      %s200 = sadd.s32 %s198, %s199
      %s201 = smul.addr %s200, 4
      %s202 = scalar_lea.vmem %s0, %s201
      %p203 = pneg %p51
      %p204 = pneg %p48
      %p205 = pneg %p72
      %p206 = pneg %p69
      %p207 = pneg %p93
      %p208 = pneg %p90
      %p209 = pneg %p121
      %p210 = pneg %p118
      %s211 = smul.u32 2, %s21
      %p212 = scmp.lt.s32.totalorder %s20, 1
      %s213 = scalar_select %p212, %s20, 1
      %p214 = scmp.lt.s32.totalorder %s211, 1
      %s215 = scalar_select %p214, %s211, 1
      %s216 = smul.addr %s213, 2
      %s217 = sadd.s32 %s215, %s216
      %s218 = smul.addr %s217, 2
      %s219 = scalar_lea.vmem %s3, %s218
      %p220 = pneg %p149
      %p221 = pneg %p146
      %s222 = smul.u32 2, %s21
      %p223 = scmp.lt.s32.totalorder %s20, 1
      %s224 = scalar_select %p223, %s20, 1
      %p225 = scmp.lt.s32.totalorder %s222, 1
      %s226 = scalar_select %p225, %s222, 1
      %s227 = smul.addr %s224, 2
      %s228 = sadd.s32 %s226, %s227
      %s229 = smul.addr %s228, 2
      %s230 = scalar_lea.vmem %s4, %s229
      %s231 = smul.u32 2, %s21
      %p232 = scmp.lt.s32.totalorder %s20, 1
      %s233 = scalar_select %p232, %s20, 1
      %p234 = scmp.lt.s32.totalorder %s231, 1
      %s235 = scalar_select %p234, %s231, 1
      %s236 = smul.addr %s233, 2
      %s237 = sadd.s32 %s235, %s236
      %s238 = smul.addr %s237, 4
      %s239 = scalar_lea.vmem %s0, %s238
      %s240 = smul.u32 2, %s21
      %s241 = smul.u32 2, %s21
      %p242 = scmp.lt.s32.totalorder %s20, 1
      %s243 = scalar_select %p242, %s20, 1
      %p244 = scmp.lt.s32.totalorder %s241, 1
      %s245 = scalar_select %p244, %s241, 1
      %s246 = smul.addr %s243, 2
      %s247 = sadd.s32 %s245, %s246
      %s248 = smul.addr %s247, 2
      %s249 = scalar_lea.vmem %s3, %s248
      %s250 = smul.u32 2, %s21
      %s251 = smul.u32 2, %s21
      %p252 = scmp.lt.s32.totalorder %s20, 1
      %s253 = scalar_select %p252, %s20, 1
      %p254 = scmp.lt.s32.totalorder %s251, 1
      %s255 = scalar_select %p254, %s251, 1
      %s256 = smul.addr %s253, 2
      %s257 = sadd.s32 %s255, %s256
      %s258 = smul.addr %s257, 2
      %s259 = scalar_lea.vmem %s4, %s258
      %s260 = smul.u32 2, %s21
      %v261 = vld [vmem:[%s1] sm:$0xff]
      %v262 = vld [vmem:[%s239] sm:$0xff]
      %v263 = vld [vmem:[%s2] sm:$0xff]
      %265 = vset.pattern.permute.xlu0 0
      %266 = vperm.xlu0 %265, %v263
      %v267 = vpop.permute.xlu0 %266
      %v270 = vcombine.high %v262, %v262
      %vm271 = vcmask 31744
      %v273 = vsel %vm271, %v261, 0
      %vm275 = vcmask 1043456
      %v276 = vsel %vm275, %v262, 0
      %v278 = vsel %vm275, %v270, 0
      %280 = vmatprep.subr.mxu0 %v278
      %281 = vmatpush1.msra.mxu0 %v276
      %282 = vmatprep.subr.mxu0 0.0
      %283 = vmatpush1.msra.mxu0 0.0
      %284 = vmatprep.subr.mxu0 0.0
      %285 = vmatpush1.msra.mxu0 0.0
      %286 = vmatprep.subr.mxu0 0.0
      %287 = vmatpush1.msra.mxu0 0.0
      %288 = vmatprep.subr.mxu0 0.0
      %289 = vmatpush1.msra.mxu0 0.0
      %290 = vmatprep.subr.mxu0 0.0
      %291 = vmatpush1.msra.mxu0 0.0
      %292 = vmatprep.subr.mxu0 0.0
      %293 = vmatpush1.msra.mxu0 0.0
      %294 = vmatprep.subr.mxu0 0.0
      %295 = vmatpush1.msra.mxu0 0.0
      %296 = vmatprep.subr.mxu0 0.0
      %297 = vmatpush1.msra.mxu0 0.0
      %298 = vmatprep.subr.mxu0 0.0
      %299 = vmatpush1.msra.mxu0 0.0
      %300 = vmatprep.subr.mxu0 0.0
      %301 = vmatpush1.msra.mxu0 0.0
      %302 = vmatprep.subr.mxu0 0.0
      %303 = vmatpush1.msra.mxu0 0.0
      %304 = vmatprep.subr.mxu0 0.0
      %305 = vmatpush1.msra.mxu0 0.0
      %306 = vmatprep.subr.mxu0 0.0
      %307 = vmatpush1.msra.mxu0 0.0
      %308 = vmatprep.subr.mxu0 0.0
      %309 = vmatpush1.msra.mxu0 0.0
      %310 = vmatprep.subr.mxu0 0.0
      %311 = vmatpush1.msra.mxu0 0.0
      %312 = vmatprep.subr.mxu0 0.0
      %313 = vmatpush1.msra.mxu0 0.0
      %314 = vmatprep.subr.mxu0 0.0
      %315 = vmatpush1.msra.mxu0 0.0
      %316 = vmatprep.subr.mxu0 0.0
      %317 = vmatpush1.msra.mxu0 0.0
      %318 = vmatprep.subr.mxu0 0.0
      %319 = vmatpush1.msra.mxu0 0.0
      %320 = vmatprep.subr.mxu0 0.0
      %321 = vmatpush1.msra.mxu0 0.0
      %322 = vmatprep.subr.mxu0 0.0
      %323 = vmatpush1.msra.mxu0 0.0
      %324 = vmatprep.subr.mxu0 0.0
      %325 = vmatpush1.msra.mxu0 0.0
      %326 = vmatprep.subr.mxu0 0.0
      %327 = vmatpush1.msra.mxu0 0.0
      %328 = vmatprep.subr.mxu0 0.0
      %329 = vmatpush1.msra.mxu0 0.0
      %330 = vmatprep.subr.mxu0 0.0
      %331 = vmatpush1.msra.mxu0 0.0
      %332 = vmatprep.subr.mxu0 0.0
      %333 = vmatpush1.msra.mxu0 0.0
      %334 = vmatprep.subr.mxu0 0.0
      %335 = vmatpush1.msra.mxu0 0.0
      %336 = vmatprep.subr.mxu0 0.0
      %337 = vmatpush1.msra.mxu0 0.0
      %338 = vmatprep.subr.mxu0 0.0
      %339 = vmatpush1.msra.mxu0 0.0
      %340 = vmatprep.subr.mxu0 0.0
      %341 = vmatpush1.msra.mxu0 0.0
      %342 = vmatprep.subr.mxu0 0.0
      %343 = vmatpush1.msra.mxu0 0.0
      %344 = vmatprep.mubr.f32.mxu0 0.0
      %345 = vmatmul.mubr.f32.gmra.mrb[0].mxu0 %v273
      %v346 = vpop.f32.mrb[0].mxu0
      %v347 = vadd.f32 %v267, %v346
      %v348 = vpop.f32.mrb[0].mxu0
      %v349 = vadd.f32 %v267, %v348
      %350 = vdwg.mxu0
      %v351 = vpack.c.bf16 %v347, %v347
      %v352 = vpack.c.bf16 %v349, %v349
      %v355 = vcombine.low %v351, %v352
      %v357 = vunpack.c.l.s4 1983009808
      %v358 = vunpack.c.0.s8 %v357
      %v359 = vlaneseq
      %v360 = vshrl.u32 %v359, 7
      %v361 = vsub.s32 %v358, %v360
      %v362 = vrot.slane %v355, %v361
      %364 = vst [vmem:[%s249] sm:$0xf] %v362
      %v365 = vcombine.high %v362, %v362
      %367 = vst [vmem:[%s259] sm:$0xf] %v365
      %s368 = smul.u32 2, %s21
      %p369 = scmp.lt.s32.totalorder %s20, 1
      %s370 = scalar_select %p369, %s20, 1
      %p371 = scmp.lt.s32.totalorder %s368, 1
      %s372 = scalar_select %p371, %s368, 1
      %s373 = smul.addr %s370, 2
      %s374 = sadd.s32 %s372, %s373
      %s375 = smul.addr %s374, 2
      %s376 = scalar_lea.vmem %s3, %s375
      %s377 = smul.u32 2, %s21
      %p378 = scmp.lt.s32.totalorder %s20, 1
      %s379 = scalar_select %p378, %s20, 1
      %p380 = scmp.lt.s32.totalorder %s377, 1
      %s381 = scalar_select %p380, %s377, 1
      %s382 = smul.addr %s379, 2
      %s383 = sadd.s32 %s381, %s382
      %s384 = smul.addr %s383, 2
      %s385 = scalar_lea.vmem %s4, %s384
      // Predicated region
      $region33: #{dpconv_forward.3} parent=31 // pred_check
        %p386 = pneg %p118
      $region34: #{dpconv_forward.3} parent=31 // pred_check_branch
        %388 = sbr.rel (%p386) target = $region36
      $region35: #{dpconv_forward.3} parent=31 // pred_region
        %s389 = smul.u32 2, %s21
      $region36: #{dpconv_forward.3} parent=31 // pred_fallthru
        _
      // Predicated region
      $region37: #{dpconv_forward.3} parent=31 // pred_check
        %p390 = pneg %p146
      $region38: #{dpconv_forward.3} parent=31 // pred_check_branch
        %392 = sbr.rel (%p390) target = $region40
      $region39: #{dpconv_forward.3} parent=31 // pred_region
        %s393 = smul.u32 2, %s21
      $region40: #{dpconv_forward.3} parent=31 // pred_fallthru
        _
    $region32: #{dpconv_forward.3} parent=5 // pred_fallthru
      _
    %p394 = scmp.le.s32.totalorder 2, %s11
    // Predicated region
    $region41: #{dpconv_forward.3} parent=5 // pred_check
      %p395 = pneg %p394
    $region42: #{dpconv_forward.3} parent=5 // pred_check_branch
      %397 = sbr.rel (%p395) target = $region44
    $region43: #{dpconv_forward.3} parent=5 // pred_region
      %s398 = ssub.s32 %s11, 2
      // Predicated region
      $region45: #{dpconv_forward.3} parent=43 // pred_check
        %p399 = pneg %p124
      $region46: #{dpconv_forward.3} parent=43 // pred_check_branch
        %401 = sbr.rel (%p399) target = $region48
      $region47: #{dpconv_forward.3} parent=43 // pred_region
        %s402 = smul.u32 2, %s23
        %p403 = scmp.lt.s32.totalorder %s22, 1
        %s404 = scalar_select %p403, %s22, 1
        %p405 = scmp.lt.s32.totalorder %s402, 1
        %s406 = scalar_select %p405, %s402, 1
        %s407 = smul.addr %s404, 2
        %s408 = sadd.s32 %s406, %s407
        %s409 = smul.addr %s408, 2
        %s410 = scalar_lea.vmem %s3, %s409
      $region48: #{dpconv_forward.3} parent=43 // pred_fallthru
        _
      // Predicated region
      $region49: #{dpconv_forward.3} parent=43 // pred_check
        %p411 = pneg %p152
      $region50: #{dpconv_forward.3} parent=43 // pred_check_branch
        %413 = sbr.rel (%p411) target = $region52
      $region51: #{dpconv_forward.3} parent=43 // pred_region
        %s414 = smul.u32 2, %s23
        %p415 = scmp.lt.s32.totalorder %s22, 1
        %s416 = scalar_select %p415, %s22, 1
        %p417 = scmp.lt.s32.totalorder %s414, 1
        %s418 = scalar_select %p417, %s414, 1
        %s419 = smul.addr %s416, 2
        %s420 = sadd.s32 %s418, %s419
        %s421 = smul.addr %s420, 2
        %s422 = scalar_lea.vmem %s4, %s421
      $region52: #{dpconv_forward.3} parent=43 // pred_fallthru
        _
    $region44: #{dpconv_forward.3} parent=5 // pred_fallthru
      _
  $region6: #{dpconv_forward.3} parent=0 // loop_footer
    %s15 = sadd.s32 1, %s11
  $region7: #{dpconv_forward.3} parent=0 // loop_footer_branch
    %10 = sbr.rel target = $region3
  $region8: #{dpconv_forward.3} parent=0 // loop_exit
    _

// kernel: dpconv_forward.4
$region0: #{dpconv_forward.4}
  #allocation0 [shape = 'u32[]', space=smem, size = 0x4, offset = 0x4, fixed_abs, tag = 'smem constant byte address 0x4 - core index']
  #allocation1 [shape = 'u32[144,128]{1,0:T(1,128)}', space=vmem, size = 0x12000, scoped, tag = 'internal scratch']
  %s0 = inlined_call_operand.vmem [shape: bf16[2,4,256], index: 0, kind: input, shape index: {}]
  %s1 = inlined_call_operand.vmem [shape: f32[2,256,128], index: 1, kind: input, shape index: {}]
  %s2 = inlined_call_operand.vmem [shape: f32[36,4], index: 2, kind: input, shape index: {}]
  %s3 = inlined_call_operand.vmem [shape: f32[4,1], index: 3, kind: input, shape index: {}]
  %s4 = inlined_call_operand.vmem [shape: f32[9,128], index: 4, kind: input, shape index: {}]
  %s5 = inlined_call_operand.vmem [shape: f32[2,4], index: 5, kind: input, shape index: {}]
  %s6 = inlined_call_operand.vmem [shape: f32[4,2], index: 6, kind: input, shape index: {}]
  %s7 = inlined_call_operand.hbm [shape: f32[128,8], index: 7, kind: input, shape index: {}]
  %s8 = inlined_call_operand.hbm [shape: f32[8,128], index: 8, kind: input, shape index: {}]
  %s9 = inlined_call_operand.vmem [shape: bf16[2,2,4,128], index: 9, kind: output, shape index: {}]
  %s10 = sld [smem:[#allocation0]]
  $region77: #{dpconv_forward.4} parent=0
    _
  %s12 = ssub.s32 1, %s10
  %s13 = scalar_select 0, %s12, %s10
  $region1: #{dpconv_forward.4} parent=0
    #allocation2 [shape = 'u8[65536]{0}', space=vmem, size = 0x10000, scoped, tag = 'input window, operand 7, single buffered']
    #allocation3 [shape = 's32[2]{0}', space=sflag, size = 0x8, scoped, tag = 'scoped memory for dpconv_forward.4']
    #allocation4 [shape = 'u8[4096]{0}', space=vmem, size = 0x1000, scoped, tag = 'input window, operand 8, single buffered']
    #allocation5 [shape = 's32[1]{0}', space=sflag, size = 0x4, scoped, tag = 'scoped memory for dpconv_forward.4']
    %14 = vsyncpa [#allocation3], 0
    %15 = vsyncpa [#allocation5], 0
    loop: start=0, step=1, limit=6
    $region2: #{dpconv_forward.4} parent=1 // loop_pre_header
      _
    $region3: #{dpconv_forward.4} parent=1 // loop_header
      %s17 = sphi 0, %s21
      %p18 = scmp.ge.s32.totalorder %s17, 6
      %s24 = sphi 0, %s36
      %s25 = sphi 0, %s32
      %s26 = sphi 0, %s24
      %s27 = sphi 0, %s25
      %s28 = sphi 0, %s26
      %s29 = sphi 0, %s27
      %s39 = sphi 0, %s41
      %s42 = sphi 0, %s39
      %s43 = sphi 0, %s42
      %s59 = sphi 0, %s43
      %s65 = sphi 0, %s67
      %s68 = sphi 0, %s65
      %s69 = sphi 0, %s68
      %s85 = sphi 0, %s69
      %s89 = sphi 0, %s89
      %s91 = sphi 0, %s89
      %s92 = sphi 0, %s91
      %s106 = sphi 0, %s92
      %s110 = sphi 0, %s110
      %s112 = sphi 0, %s110
      %s113 = sphi 0, %s112
      %s127 = sphi 0, %s113
      %s131 = sphi 0, %s131
      %s133 = sphi 0, %s131
      %s134 = sphi 0, %s133
      %s148 = sphi 0, %s134
      %s152 = sphi 0, %s152
      %s154 = sphi 0, %s152
      %s155 = sphi 0, %s154
      %s169 = sphi 0, %s155
      %s173 = sphi 0, %s173
      %s175 = sphi 0, %s173
      %s176 = sphi 0, %s175
      %s190 = sphi 0, %s176
      %s194 = sphi 0, %s194
      %s196 = sphi 0, %s194
      %s197 = sphi 0, %s196
      %s211 = sphi 0, %s197
      %s215 = sphi 0, %s215
      %s217 = sphi 0, %s215
      %s218 = sphi 0, %s217
      %s232 = sphi 0, %s218
      %s240 = sphi 0, %s242
      %s243 = sphi 0, %s240
      %s244 = sphi 0, %s243
      %s260 = sphi 0, %s244
    $region4: #{dpconv_forward.4} parent=1 // loop_header_branch
      %20 = sbr.rel (%p18) target = $region8
    $region5: #{dpconv_forward.4} parent=1 // loop_body
      %s22 = ssub.s32 %s17, 1
      %s23 = ssub.s32 %s17, 2
      %s30 = sadd.s32 1, %s25
      %p31 = scmp.ge.s32.totalorder %s30, 2
      %s32 = scalar_select %p31, 0, %s30
      %s33 = sadd.s32 1, %s24
      %s34 = scalar_select %p31, %s33, %s24
      %p35 = scmp.ge.s32.totalorder %s34, 2
      %s36 = scalar_select %p35, 0, %s34
      %s37 = ssub.s32 %s24, %s36
      %p38 = scmp.eq.s32.totalorder %s37, 0
      %s40 = sadd.s32 %s39, 1
      %s41 = scalar_select %p38, %s39, %s40
      %p44 = pneg %p38
      %p45 = scmp.eq.s32.totalorder %s17, 3
      %p46 = por %p44, %p45
      %p47 = scmp.ne.s32.totalorder %s39, %s42
      %p48 = scmp.eq.s32.totalorder %s17, 0
      %p49 = por %p47, %p48
      %p50 = scmp.ne.s32.totalorder %s39, %s42
      %p51 = scmp.eq.s32.totalorder %s22, 3
      %p52 = por %p50, %p51
      %p53 = scmp.ne.s32.totalorder %s42, %s43
      %p54 = scmp.eq.s32.totalorder %s22, 0
      %p55 = por %p53, %p54
      %p56 = scmp.ne.s32.totalorder %s42, %s43
      %p57 = scmp.eq.s32.totalorder %s23, 3
      %p58 = por %p56, %p57
      %p60 = scmp.ne.s32.totalorder %s43, %s59
      %p61 = scmp.eq.s32.totalorder %s23, 0
      %p62 = por %p60, %p61
      %s63 = ssub.s32 %s25, %s32
      %p64 = scmp.eq.s32.totalorder %s63, 0
      %s66 = sadd.s32 %s65, 1
      %s67 = scalar_select %p64, %s65, %s66
      %p70 = pneg %p64
      %p71 = scmp.eq.s32.totalorder %s17, 3
      %p72 = por %p70, %p71
      %p73 = scmp.ne.s32.totalorder %s65, %s68
      %p74 = scmp.eq.s32.totalorder %s17, 0
      %p75 = por %p73, %p74
      %p76 = scmp.ne.s32.totalorder %s65, %s68
      %p77 = scmp.eq.s32.totalorder %s22, 3
      %p78 = por %p76, %p77
      %p79 = scmp.ne.s32.totalorder %s68, %s69
      %p80 = scmp.eq.s32.totalorder %s22, 0
      %p81 = por %p79, %p80
      %p82 = scmp.ne.s32.totalorder %s68, %s69
      %p83 = scmp.eq.s32.totalorder %s23, 3
      %p84 = por %p82, %p83
      %p86 = scmp.ne.s32.totalorder %s69, %s85
      %p87 = scmp.eq.s32.totalorder %s23, 0
      %p88 = por %p86, %p87
      %s90 = sadd.s32 %s89, 1
      %p93 = scmp.eq.s32.totalorder %s17, 3
      %p94 = scmp.ne.s32.totalorder %s89, %s91
      %p95 = scmp.eq.s32.totalorder %s17, 0
      %p96 = por %p94, %p95
      %p97 = scmp.ne.s32.totalorder %s89, %s91
      %p98 = scmp.eq.s32.totalorder %s22, 3
      %p99 = por %p97, %p98
      %p100 = scmp.ne.s32.totalorder %s91, %s92
      %p101 = scmp.eq.s32.totalorder %s22, 0
      %p102 = por %p100, %p101
      %p103 = scmp.ne.s32.totalorder %s91, %s92
      %p104 = scmp.eq.s32.totalorder %s23, 3
      %p105 = por %p103, %p104
      %p107 = scmp.ne.s32.totalorder %s92, %s106
      %p108 = scmp.eq.s32.totalorder %s23, 0
      %p109 = por %p107, %p108
      %s111 = sadd.s32 %s110, 1
      %p114 = scmp.eq.s32.totalorder %s17, 3
      %p115 = scmp.ne.s32.totalorder %s110, %s112
      %p116 = scmp.eq.s32.totalorder %s17, 0
      %p117 = por %p115, %p116
      %p118 = scmp.ne.s32.totalorder %s110, %s112
      %p119 = scmp.eq.s32.totalorder %s22, 3
      %p120 = por %p118, %p119
      %p121 = scmp.ne.s32.totalorder %s112, %s113
      %p122 = scmp.eq.s32.totalorder %s22, 0
      %p123 = por %p121, %p122
      %p124 = scmp.ne.s32.totalorder %s112, %s113
      %p125 = scmp.eq.s32.totalorder %s23, 3
      %p126 = por %p124, %p125
      %p128 = scmp.ne.s32.totalorder %s113, %s127
      %p129 = scmp.eq.s32.totalorder %s23, 0
      %p130 = por %p128, %p129
      %s132 = sadd.s32 %s131, 1
      %p135 = scmp.eq.s32.totalorder %s17, 3
      %p136 = scmp.ne.s32.totalorder %s131, %s133
      %p137 = scmp.eq.s32.totalorder %s17, 0
      %p138 = por %p136, %p137
      %p139 = scmp.ne.s32.totalorder %s131, %s133
      %p140 = scmp.eq.s32.totalorder %s22, 3
      %p141 = por %p139, %p140
      %p142 = scmp.ne.s32.totalorder %s133, %s134
      %p143 = scmp.eq.s32.totalorder %s22, 0
      %p144 = por %p142, %p143
      %p145 = scmp.ne.s32.totalorder %s133, %s134
      %p146 = scmp.eq.s32.totalorder %s23, 3
      %p147 = por %p145, %p146
      %p149 = scmp.ne.s32.totalorder %s134, %s148
      %p150 = scmp.eq.s32.totalorder %s23, 0
      %p151 = por %p149, %p150
      %s153 = sadd.s32 %s152, 1
      %p156 = scmp.eq.s32.totalorder %s17, 3
      %p157 = scmp.ne.s32.totalorder %s152, %s154
      %p158 = scmp.eq.s32.totalorder %s17, 0
      %p159 = por %p157, %p158
      %p160 = scmp.ne.s32.totalorder %s152, %s154
      %p161 = scmp.eq.s32.totalorder %s22, 3
      %p162 = por %p160, %p161
      %p163 = scmp.ne.s32.totalorder %s154, %s155
      %p164 = scmp.eq.s32.totalorder %s22, 0
      %p165 = por %p163, %p164
      %p166 = scmp.ne.s32.totalorder %s154, %s155
      %p167 = scmp.eq.s32.totalorder %s23, 3
      %p168 = por %p166, %p167
      %p170 = scmp.ne.s32.totalorder %s155, %s169
      %p171 = scmp.eq.s32.totalorder %s23, 0
      %p172 = por %p170, %p171
      %s174 = sadd.s32 %s173, 1
      %p177 = scmp.eq.s32.totalorder %s17, 3
      %p178 = scmp.ne.s32.totalorder %s173, %s175
      %p179 = scmp.eq.s32.totalorder %s17, 0
      %p180 = por %p178, %p179
      %p181 = scmp.ne.s32.totalorder %s173, %s175
      %p182 = scmp.eq.s32.totalorder %s22, 3
      %p183 = por %p181, %p182
      %p184 = scmp.ne.s32.totalorder %s175, %s176
      %p185 = scmp.eq.s32.totalorder %s22, 0
      %p186 = por %p184, %p185
      %p187 = scmp.ne.s32.totalorder %s175, %s176
      %p188 = scmp.eq.s32.totalorder %s23, 3
      %p189 = por %p187, %p188
      %p191 = scmp.ne.s32.totalorder %s176, %s190
      %p192 = scmp.eq.s32.totalorder %s23, 0
      %p193 = por %p191, %p192
      %s195 = sadd.s32 %s194, 1
      %p198 = scmp.eq.s32.totalorder %s17, 3
      %p199 = scmp.ne.s32.totalorder %s194, %s196
      %p200 = scmp.eq.s32.totalorder %s17, 0
      %p201 = por %p199, %p200
      %p202 = scmp.ne.s32.totalorder %s194, %s196
      %p203 = scmp.eq.s32.totalorder %s22, 3
      %p204 = por %p202, %p203
      %p205 = scmp.ne.s32.totalorder %s196, %s197
      %p206 = scmp.eq.s32.totalorder %s22, 0
      %p207 = por %p205, %p206
      %p208 = scmp.ne.s32.totalorder %s196, %s197
      %p209 = scmp.eq.s32.totalorder %s23, 3
      %p210 = por %p208, %p209
      %p212 = scmp.ne.s32.totalorder %s197, %s211
      %p213 = scmp.eq.s32.totalorder %s23, 0
      %p214 = por %p212, %p213
      %s216 = sadd.s32 %s215, 1
      %p219 = scmp.eq.s32.totalorder %s17, 3
      %p220 = scmp.ne.s32.totalorder %s215, %s217
      %p221 = scmp.eq.s32.totalorder %s17, 0
      %p222 = por %p220, %p221
      %p223 = scmp.ne.s32.totalorder %s215, %s217
      %p224 = scmp.eq.s32.totalorder %s22, 3
      %p225 = por %p223, %p224
      %p226 = scmp.ne.s32.totalorder %s217, %s218
      %p227 = scmp.eq.s32.totalorder %s22, 0
      %p228 = por %p226, %p227
      %p229 = scmp.ne.s32.totalorder %s217, %s218
      %p230 = scmp.eq.s32.totalorder %s23, 3
      %p231 = por %p229, %p230
      %p233 = scmp.ne.s32.totalorder %s218, %s232
      %p234 = scmp.eq.s32.totalorder %s23, 0
      %p235 = por %p233, %p234
      %s236 = ssub.s32 %s24, %s36
      %s237 = ssub.s32 %s25, %s32
      %s238 = sor.u32 %s236, %s237
      %p239 = scmp.eq.s32.totalorder %s238, 0
      %s241 = sadd.s32 %s240, 1
      %s242 = scalar_select %p239, %s240, %s241
      %p245 = pneg %p239
      %p246 = scmp.eq.s32.totalorder %s17, 3
      %p247 = por %p245, %p246
      %p248 = scmp.ne.s32.totalorder %s240, %s243
      %p249 = scmp.eq.s32.totalorder %s17, 0
      %p250 = por %p248, %p249
      %p251 = scmp.ne.s32.totalorder %s240, %s243
      %p252 = scmp.eq.s32.totalorder %s22, 3
      %p253 = por %p251, %p252
      %p254 = scmp.ne.s32.totalorder %s243, %s244
      %p255 = scmp.eq.s32.totalorder %s22, 0
      %p256 = por %p254, %p255
      %p257 = scmp.ne.s32.totalorder %s243, %s244
      %p258 = scmp.eq.s32.totalorder %s23, 3
      %p259 = por %p257, %p258
      %p261 = scmp.ne.s32.totalorder %s244, %s260
      %p262 = scmp.eq.s32.totalorder %s23, 0
      %p263 = por %p261, %p262
      %p264 = scmp.le.s32.totalorder 1, %s17
      %p265 = scmp.lt.s32.totalorder %s17, 5
      %p266 = pnand %p264, %p265
      %p267 = pneg %p266
      // Predicated region
      $region9: #{dpconv_forward.4} parent=5 // pred_check
        _
      $region10: #{dpconv_forward.4} parent=5 // pred_check_branch
        %269 = sbr.rel (%p266) target = $region12
      $region11: #{dpconv_forward.4} parent=5 // pred_region
        %s270 = ssub.s32 %s17, 1
        // Predicated region
        $region13: #{dpconv_forward.4} parent=11 // pred_check
          %p271 = pneg %p102
        $region14: #{dpconv_forward.4} parent=11 // pred_check_branch
          %273 = sbr.rel (%p271) target = $region16
        $region15: #{dpconv_forward.4} parent=11 // pred_region
          _
        $region16: #{dpconv_forward.4} parent=11 // pred_fallthru
          _
        // Predicated region
        $region17: #{dpconv_forward.4} parent=11 // pred_check
          %p274 = pneg %p123
        $region18: #{dpconv_forward.4} parent=11 // pred_check_branch
          %276 = sbr.rel (%p274) target = $region20
        $region19: #{dpconv_forward.4} parent=11 // pred_region
          _
        $region20: #{dpconv_forward.4} parent=11 // pred_fallthru
          _
        // Predicated region
        $region21: #{dpconv_forward.4} parent=11 // pred_check
          %p277 = pneg %p144
        $region22: #{dpconv_forward.4} parent=11 // pred_check_branch
          %279 = sbr.rel (%p277) target = $region24
        $region23: #{dpconv_forward.4} parent=11 // pred_region
          _
        $region24: #{dpconv_forward.4} parent=11 // pred_fallthru
          _
        // Predicated region
        $region25: #{dpconv_forward.4} parent=11 // pred_check
          %p280 = pneg %p165
        $region26: #{dpconv_forward.4} parent=11 // pred_check_branch
          %282 = sbr.rel (%p280) target = $region28
        $region27: #{dpconv_forward.4} parent=11 // pred_region
          _
        $region28: #{dpconv_forward.4} parent=11 // pred_fallthru
          _
        // Predicated region
        $region29: #{dpconv_forward.4} parent=11 // pred_check
          %p283 = pneg %p186
        $region30: #{dpconv_forward.4} parent=11 // pred_check_branch
          %285 = sbr.rel (%p283) target = $region32
        $region31: #{dpconv_forward.4} parent=11 // pred_region
          _
        $region32: #{dpconv_forward.4} parent=11 // pred_fallthru
          _
        // Predicated region
        $region33: #{dpconv_forward.4} parent=11 // pred_check
          %p286 = pneg %p207
        $region34: #{dpconv_forward.4} parent=11 // pred_check_branch
          %288 = sbr.rel (%p286) target = $region36
        $region35: #{dpconv_forward.4} parent=11 // pred_region
          %s290 = ssub.s32 2048, 2048
          %291 = vsyncadd [#allocation3], %s290
          %s292 = sshll.u32 [#allocation2], 4
          %s293 = int_to_ptr.vmem [resolvable:$true] %s292
          %298 = dma.hbm_to_vmem [thread:$0]  %s7, 2048, %s293, [#allocation3], 128, 128, 8
        $region36: #{dpconv_forward.4} parent=11 // pred_fallthru
          _
        // Predicated region
        $region37: #{dpconv_forward.4} parent=11 // pred_check
          %p299 = pneg %p228
        $region38: #{dpconv_forward.4} parent=11 // pred_check_branch
          %301 = sbr.rel (%p299) target = $region40
        $region39: #{dpconv_forward.4} parent=11 // pred_region
          %s303 = ssub.s32 128, 128
          %304 = vsyncadd [#allocation5], %s303
          %s306 = sshll.u32 [#allocation4], 4
          %s307 = int_to_ptr.vmem [resolvable:$true] %s306
          %309 = dma.hbm_to_vmem [thread:$0]  %s8, 128, %s307, [#allocation5]
        $region40: #{dpconv_forward.4} parent=11 // pred_fallthru
          _
      $region12: #{dpconv_forward.4} parent=5 // pred_fallthru
        _
      %p310 = scmp.lt.s32.totalorder %s17, 4
      // Predicated region
      $region41: #{dpconv_forward.4} parent=5 // pred_check
        %p311 = pneg %p310
      $region42: #{dpconv_forward.4} parent=5 // pred_check_branch
        %313 = sbr.rel (%p311) target = $region44
      $region43: #{dpconv_forward.4} parent=5 // pred_region
        // Predicated region
        $region45: #{dpconv_forward.4} parent=43 // pred_check
          %p314 = pneg %p49
        $region46: #{dpconv_forward.4} parent=43 // pred_check_branch
          %316 = sbr.rel (%p314) target = $region48
        $region47: #{dpconv_forward.4} parent=43 // pred_region
          %p317 = scmp.lt.s32.totalorder %s24, 1
          %s318 = scalar_select %p317, %s24, 1
          %s319 = smul.addr %s318, 2
          %s320 = smul.addr %s319, 2
          %s321 = scalar_lea.vmem %s0, %s320
        $region48: #{dpconv_forward.4} parent=43 // pred_fallthru
          _
        // Predicated region
        $region49: #{dpconv_forward.4} parent=43 // pred_check
          %p322 = pneg %p75
        $region50: #{dpconv_forward.4} parent=43 // pred_check_branch
          %324 = sbr.rel (%p322) target = $region52
        $region51: #{dpconv_forward.4} parent=43 // pred_region
          %p325 = scmp.lt.s32.totalorder %s25, 1
          %s326 = scalar_select %p325, %s25, 1
          %s327 = smul.addr %s326, 32
          %s328 = smul.addr %s327, 8
          %s329 = scalar_lea.vmem %s1, %s328
        $region52: #{dpconv_forward.4} parent=43 // pred_fallthru
          _
      $region44: #{dpconv_forward.4} parent=5 // pred_fallthru
        _
      %p330 = scmp.le.s32.totalorder 1, %s17
      %p331 = scmp.lt.s32.totalorder %s17, 5
      %p332 = pnand %p330, %p331
      %p333 = pneg %p332
      // Predicated region
      $region53: #{dpconv_forward.4} parent=5 // pred_check
        _
      $region54: #{dpconv_forward.4} parent=5 // pred_check_branch
        %335 = sbr.rel (%p332) target = $region56
      $region55: #{dpconv_forward.4} parent=5 // pred_region
        %s336 = ssub.s32 %s17, 1
        // Predicated region
        $region57: #{dpconv_forward.4} parent=55 // pred_check
          %p337 = pneg %p207
        $region58: #{dpconv_forward.4} parent=55 // pred_check_branch
          %339 = sbr.rel (%p337) target = $region60
        $region59: #{dpconv_forward.4} parent=55 // pred_region
          %340 = dma.done [#allocation3], 2048
        $region60: #{dpconv_forward.4} parent=55 // pred_fallthru
          _
        // Predicated region
        $region61: #{dpconv_forward.4} parent=55 // pred_check
          %p341 = pneg %p228
        $region62: #{dpconv_forward.4} parent=55 // pred_check_branch
          %343 = sbr.rel (%p341) target = $region64
        $region63: #{dpconv_forward.4} parent=55 // pred_region
          %344 = dma.done [#allocation5], 128
        $region64: #{dpconv_forward.4} parent=55 // pred_fallthru
          _
        %p345 = scmp.lt.s32.totalorder %s26, 1
        %s346 = scalar_select %p345, %s26, 1
        %s347 = smul.addr %s346, 2
        %s348 = smul.addr %s347, 2
        %s349 = scalar_lea.vmem %s0, %s348
        %p350 = pneg %p55
        %p351 = pneg %p52
        %p352 = scmp.lt.s32.totalorder %s27, 1
        %s353 = scalar_select %p352, %s27, 1
        %s354 = smul.addr %s353, 32
        %s355 = smul.addr %s354, 8
        %s356 = scalar_lea.vmem %s1, %s355
        %p357 = pneg %p81
        %p358 = pneg %p78
        %p359 = pneg %p102
        %p360 = pneg %p99
        %p361 = pneg %p123
        %p362 = pneg %p120
        %p363 = pneg %p144
        %p364 = pneg %p141
        %p365 = pneg %p165
        %p366 = pneg %p162
        %p367 = pneg %p186
        %p368 = pneg %p183
        %p369 = pneg %p207
        %p370 = pneg %p204
        %p371 = pneg %p228
        %p372 = pneg %p225
        %p373 = pneg %p256
        %p374 = pneg %p253
        %p375 = scmp.lt.s32.totalorder %s26, 1
        %s376 = scalar_select %p375, %s26, 1
        %p377 = scmp.lt.s32.totalorder %s27, 1
        %s378 = scalar_select %p377, %s27, 1
        %s379 = smul.addr %s376, 2
        %s380 = sadd.s32 %s378, %s379
        %s381 = smul.addr %s380, 2
        %s382 = scalar_lea.vmem %s9, %s381
        %p383 = scmp.lt.s32.totalorder %s26, 1
        %s384 = scalar_select %p383, %s26, 1
        %s385 = smul.addr %s384, 2
        %s386 = smul.addr %s385, 2
        %s387 = scalar_lea.vmem %s0, %s386
        %p388 = scmp.lt.s32.totalorder %s27, 1
        %s389 = scalar_select %p388, %s27, 1
        %s390 = smul.addr %s389, 32
        %s391 = smul.addr %s390, 8
        %s392 = scalar_lea.vmem %s1, %s391
        %p393 = scmp.lt.s32.totalorder %s26, 1
        %s394 = scalar_select %p393, %s26, 1
        %p395 = scmp.lt.s32.totalorder %s27, 1
        %s396 = scalar_select %p395, %s27, 1
        %s397 = smul.addr %s394, 2
        %s398 = sadd.s32 %s396, %s397
        %s399 = smul.addr %s398, 2
        %s400 = scalar_lea.vmem %s9, %s399
        %v401 = vld [vmem:[%s387] sm:$0xf]
        %v402 = vunpack.c.l.bf16 %v401
        %v403 = vld [vmem:[%s392] sm:$0xff]
        %v404 = vld [vmem:[%s392 + $0x8] sm:$0xff]
        %v405 = vld [vmem:[%s392 + $0x10] sm:$0xff]
        %v406 = vld [vmem:[%s392 + $0x18] sm:$0xff]
        %v407 = vld [vmem:[%s392 + $0x20] sm:$0xff]
        %v408 = vld [vmem:[%s392 + $0x28] sm:$0xff]
        %v409 = vld [vmem:[%s392 + $0x30] sm:$0xff]
        %v410 = vld [vmem:[%s392 + $0x38] sm:$0xff]
        %v411 = vld [vmem:[%s392 + $0x40] sm:$0xff]
        %v412 = vld [vmem:[%s392 + $0x48] sm:$0xff]
        %v413 = vld [vmem:[%s392 + $0x50] sm:$0xff]
        %v414 = vld [vmem:[%s392 + $0x58] sm:$0xff]
        %v415 = vld [vmem:[%s392 + $0x60] sm:$0xff]
        %v416 = vld [vmem:[%s392 + $0x68] sm:$0xff]
        %v417 = vld [vmem:[%s392 + $0x70] sm:$0xff]
        %v418 = vld [vmem:[%s392 + $0x78] sm:$0xff]
        %v419 = vld [vmem:[%s392 + $0x80] sm:$0xff]
        %v420 = vld [vmem:[%s392 + $0x88] sm:$0xff]
        %v421 = vld [vmem:[%s392 + $0x90] sm:$0xff]
        %v422 = vld [vmem:[%s392 + $0x98] sm:$0xff]
        %v423 = vld [vmem:[%s392 + $0xa0] sm:$0xff]
        %v424 = vld [vmem:[%s392 + $0xa8] sm:$0xff]
        %v425 = vld [vmem:[%s392 + $0xb0] sm:$0xff]
        %v426 = vld [vmem:[%s392 + $0xb8] sm:$0xff]
        %v427 = vld [vmem:[%s392 + $0xc0] sm:$0xff]
        %v428 = vld [vmem:[%s392 + $0xc8] sm:$0xff]
        %v429 = vld [vmem:[%s392 + $0xd0] sm:$0xff]
        %v430 = vld [vmem:[%s392 + $0xd8] sm:$0xff]
        %v431 = vld [vmem:[%s392 + $0xe0] sm:$0xff]
        %v432 = vld [vmem:[%s392 + $0xe8] sm:$0xff]
        %v433 = vld [vmem:[%s392 + $0xf0] sm:$0xff]
        %v434 = vld [vmem:[%s392 + $0xf8] sm:$0xff]
        %v436 = vcombine.high %v402, %v402
        %438 = vmatprep.subr.mxu0 0.0
        %439 = vmatpush1.msra.mxu0 %v403
        %440 = vmatprep.subr.mxu0 0.0
        %441 = vmatpush1.msra.mxu0 %v404
        %442 = vmatprep.subr.mxu0 0.0
        %443 = vmatpush1.msra.mxu0 %v405
        %444 = vmatprep.subr.mxu0 0.0
        %445 = vmatpush1.msra.mxu0 %v406
        %446 = vmatprep.subr.mxu0 0.0
        %447 = vmatpush1.msra.mxu0 %v407
        %448 = vmatprep.subr.mxu0 0.0
        %449 = vmatpush1.msra.mxu0 %v408
        %450 = vmatprep.subr.mxu0 0.0
        %451 = vmatpush1.msra.mxu0 %v409
        %452 = vmatprep.subr.mxu0 0.0
        %453 = vmatpush1.msra.mxu0 %v410
        %454 = vmatprep.subr.mxu0 0.0
        %455 = vmatpush1.msra.mxu0 %v411
        %456 = vmatprep.subr.mxu0 0.0
        %457 = vmatpush1.msra.mxu0 %v412
        %458 = vmatprep.subr.mxu0 0.0
        %459 = vmatpush1.msra.mxu0 %v413
        %460 = vmatprep.subr.mxu0 0.0
        %461 = vmatpush1.msra.mxu0 %v414
        %462 = vmatprep.subr.mxu0 0.0
        %463 = vmatpush1.msra.mxu0 %v415
        %464 = vmatprep.subr.mxu0 0.0
        %465 = vmatpush1.msra.mxu0 %v416
        %466 = vmatprep.subr.mxu0 0.0
        %467 = vmatpush1.msra.mxu0 %v417
        %468 = vmatprep.subr.mxu0 0.0
        %469 = vmatpush1.msra.mxu0 %v418
        %470 = vmatprep.subr.mxu0 0.0
        %471 = vmatpush1.msra.mxu0 %v419
        %472 = vmatprep.subr.mxu0 0.0
        %473 = vmatpush1.msra.mxu0 %v420
        %474 = vmatprep.subr.mxu0 0.0
        %475 = vmatpush1.msra.mxu0 %v421
        %476 = vmatprep.subr.mxu0 0.0
        %477 = vmatpush1.msra.mxu0 %v422
        %478 = vmatprep.subr.mxu0 0.0
        %479 = vmatpush1.msra.mxu0 %v423
        %480 = vmatprep.subr.mxu0 0.0
        %481 = vmatpush1.msra.mxu0 %v424
        %482 = vmatprep.subr.mxu0 0.0
        %483 = vmatpush1.msra.mxu0 %v425
        %484 = vmatprep.subr.mxu0 0.0
        %485 = vmatpush1.msra.mxu0 %v426
        %486 = vmatprep.subr.mxu0 0.0
        %487 = vmatpush1.msra.mxu0 %v427
        %488 = vmatprep.subr.mxu0 0.0
        %489 = vmatpush1.msra.mxu0 %v428
        %490 = vmatprep.subr.mxu0 0.0
        %491 = vmatpush1.msra.mxu0 %v429
        %492 = vmatprep.subr.mxu0 0.0
        %493 = vmatpush1.msra.mxu0 %v430
        %494 = vmatprep.subr.mxu0 0.0
        %495 = vmatpush1.msra.mxu0 %v431
        %496 = vmatprep.subr.mxu0 0.0
        %497 = vmatpush1.msra.mxu0 %v432
        %498 = vmatprep.subr.mxu0 0.0
        %499 = vmatpush1.msra.mxu0 %v433
        %500 = vmatprep.subr.mxu0 0.0
        %501 = vmatpush1.msra.mxu0 %v434
        %502 = vmatprep.mubr.f32.mxu0 %v436
        %503 = vmatmul.mubr.f32.gmra.mrb[0].mxu0 %v402
        %v504 = vpop.f32.mrb[0].mxu0
        %v505 = vadd.f32 0.0, %v504
        %v506 = vpop.f32.mrb[0].mxu0
        %507 = vdwg.mxu0
        %v508 = vld [vmem:[%s2] sm:$0xff]
        %v509 = vld [vmem:[%s2 + $0x8] sm:$0xff]
        %v510 = vld [vmem:[%s2 + $0x10] sm:$0xff]
        %v511 = vld [vmem:[%s2 + $0x18] sm:$0xff]
        %v512 = vld [vmem:[%s2 + $0x20] sm:$0xf]
        %vm513 = vcmask 31744
        %v515 = vsel %vm513, %v508, 0
        %v518 = vsel %vm513, %v509, 0
        %v521 = vsel %vm513, %v510, 0
        %v524 = vsel %vm513, %v511, 0
        %v527 = vsel %vm513, %v512, 0
        %vm529 = vcmask 1043456
        %v531 = vsel %vm529, %v505, 0
        %533 = vmatprep.subr.mxu0 0.0
        %534 = vmatpush1.msra.mxu0 %v531
        %535 = vmatprep.subr.mxu0 0.0
        %536 = vmatpush1.msra.mxu0 0.0
        %537 = vmatprep.subr.mxu0 0.0
        %538 = vmatpush1.msra.mxu0 0.0
        %539 = vmatprep.subr.mxu0 0.0
        %540 = vmatpush1.msra.mxu0 0.0
        %541 = vmatprep.subr.mxu0 0.0
        %542 = vmatpush1.msra.mxu0 0.0
        %543 = vmatprep.subr.mxu0 0.0
        %544 = vmatpush1.msra.mxu0 0.0
        %545 = vmatprep.subr.mxu0 0.0
        %546 = vmatpush1.msra.mxu0 0.0
        %547 = vmatprep.subr.mxu0 0.0
        %548 = vmatpush1.msra.mxu0 0.0
        %549 = vmatprep.subr.mxu0 0.0
        %550 = vmatpush1.msra.mxu0 0.0
        %551 = vmatprep.subr.mxu0 0.0
        %552 = vmatpush1.msra.mxu0 0.0
        %553 = vmatprep.subr.mxu0 0.0
        %554 = vmatpush1.msra.mxu0 0.0
        %555 = vmatprep.subr.mxu0 0.0
        %556 = vmatpush1.msra.mxu0 0.0
        %557 = vmatprep.subr.mxu0 0.0
        %558 = vmatpush1.msra.mxu0 0.0
        %559 = vmatprep.subr.mxu0 0.0
        %560 = vmatpush1.msra.mxu0 0.0
        %561 = vmatprep.subr.mxu0 0.0
        %562 = vmatpush1.msra.mxu0 0.0
        %563 = vmatprep.subr.mxu0 0.0
        %564 = vmatpush1.msra.mxu0 0.0
        %565 = vmatprep.subr.mxu0 0.0
        %566 = vmatpush1.msra.mxu0 0.0
        %567 = vmatprep.subr.mxu0 0.0
        %568 = vmatpush1.msra.mxu0 0.0
        %569 = vmatprep.subr.mxu0 0.0
        %570 = vmatpush1.msra.mxu0 0.0
        %571 = vmatprep.subr.mxu0 0.0
        %572 = vmatpush1.msra.mxu0 0.0
        %573 = vmatprep.subr.mxu0 0.0
        %574 = vmatpush1.msra.mxu0 0.0
        %575 = vmatprep.subr.mxu0 0.0
        %576 = vmatpush1.msra.mxu0 0.0
        %577 = vmatprep.subr.mxu0 0.0
        %578 = vmatpush1.msra.mxu0 0.0
        %579 = vmatprep.subr.mxu0 0.0
        %580 = vmatpush1.msra.mxu0 0.0
        %581 = vmatprep.subr.mxu0 0.0
        %582 = vmatpush1.msra.mxu0 0.0
        %583 = vmatprep.subr.mxu0 0.0
        %584 = vmatpush1.msra.mxu0 0.0
        %585 = vmatprep.subr.mxu0 0.0
        %586 = vmatpush1.msra.mxu0 0.0
        %587 = vmatprep.subr.mxu0 0.0
        %588 = vmatpush1.msra.mxu0 0.0
        %589 = vmatprep.subr.mxu0 0.0
        %590 = vmatpush1.msra.mxu0 0.0
        %591 = vmatprep.subr.mxu0 0.0
        %592 = vmatpush1.msra.mxu0 0.0
        %593 = vmatprep.subr.mxu0 0.0
        %594 = vmatpush1.msra.mxu0 0.0
        %595 = vmatprep.subr.mxu0 0.0
        %596 = vmatpush1.msra.mxu0 0.0
        %597 = vmatprep.mubr.f32.mxu0 0.0
        %598 = vmatmul.mubr.f32.gmra.mrb[0].mxu0 %v515
        %v599 = vpop.f32.mrb[0].mxu0
        %v600 = vadd.f32 0.0, %v599
        %v601 = vpop.f32.mrb[0].mxu0
        %602 = vmatprep.mubr.f32.mxu0 0.0
        %603 = vmatmul.mubr.f32.gmra.mrb[0].mxu0 %v518
        %v604 = vpop.f32.mrb[0].mxu0
        %v605 = vadd.f32 0.0, %v604
        %v606 = vpop.f32.mrb[0].mxu0
        %607 = vmatprep.mubr.f32.mxu0 0.0
        %608 = vmatmul.mubr.f32.gmra.mrb[0].mxu0 %v521
        %v609 = vpop.f32.mrb[0].mxu0
        %v610 = vadd.f32 0.0, %v609
        %v611 = vpop.f32.mrb[0].mxu0
        %612 = vmatprep.mubr.f32.mxu0 0.0
        %613 = vmatmul.mubr.f32.gmra.mrb[0].mxu0 %v524
        %v614 = vpop.f32.mrb[0].mxu0
        %v615 = vadd.f32 0.0, %v614
        %v616 = vpop.f32.mrb[0].mxu0
        %617 = vmatprep.mubr.f32.mxu0 0.0
        %618 = vmatmul.mubr.f32.gmra.mrb[0].mxu0 %v527
        %v619 = vpop.f32.mrb[0].mxu0
        %v620 = vadd.f32 0.0, %v619
        %v621 = vpop.f32.mrb[0].mxu0
        %622 = vdwg.mxu0
        %623 = vrot.lane.b32.xlu0 %v600, 5
        %v624 = vpop.permute.xlu0 %623
        %v625 = vld [vmem:[%s4] sm:$0x1]
        %v626 = vlaneseq
        %v627 = vshrl.u32 %v626, 7
        %v628 = vsub.s32 0, %v627
        %v629 = vrot.slane %v625, %v628
        %v630 = vmul.f32 %v624, %v629
        %v631 = vadd.f32 %v630, 0.0
        %v633 = vrot.slane %v600, 4
        %635 = vrot.lane.b32.xlu0 %v633, 4
        %v636 = vpop.permute.xlu0 %635
        %v637 = vld [vmem:[%s4 + $0x1] sm:$0x1]
        %v638 = vlaneseq
        %v639 = vshrl.u32 %v638, 7
        %v640 = vsub.s32 0, %v639
        %v641 = vrot.slane %v637, %v640
        %v642 = vmul.f32 %v636, %v641
        %v643 = vadd.f32 %v631, %v642
        %644 = vrot.lane.b32.xlu0 %v605, 3
        %v645 = vpop.permute.xlu0 %644
        %v646 = vld [vmem:[%s4 + $0x2] sm:$0x1]
        %v647 = vlaneseq
        %v648 = vshrl.u32 %v647, 7
        %v649 = vsub.s32 0, %v648
        %v650 = vrot.slane %v646, %v649
        %v651 = vmul.f32 %v645, %v650
        %v652 = vadd.f32 %v643, %v651
        %v654 = vrot.slane %v605, 4
        %656 = vrot.lane.b32.xlu0 %v654, 1
        %v657 = vpop.permute.xlu0 %656
        %v658 = vld [vmem:[%s4 + $0x3] sm:$0x1]
        %v659 = vlaneseq
        %v660 = vshrl.u32 %v659, 7
        %v661 = vsub.s32 0, %v660
        %v662 = vrot.slane %v658, %v661
        %v663 = vmul.f32 %v657, %v662
        %v664 = vadd.f32 %v652, %v663
        %v665 = vld [vmem:[%s4 + $0x4] sm:$0x1]
        %v666 = vlaneseq
        %v667 = vshrl.u32 %v666, 7
        %v668 = vsub.s32 0, %v667
        %v669 = vrot.slane %v665, %v668
        %v670 = vmul.f32 %v610, %v669
        %v671 = vadd.f32 %v664, %v670
        %v673 = vrot.slane %v610, 4
        %675 = vrot.lane.b32.xlu0 %v673, 127
        %v676 = vpop.permute.xlu0 %675
        %v677 = vld [vmem:[%s4 + $0x5] sm:$0x1]
        %v678 = vlaneseq
        %v679 = vshrl.u32 %v678, 7
        %v680 = vsub.s32 0, %v679
        %v681 = vrot.slane %v677, %v680
        %v682 = vmul.f32 %v676, %v681
        %v683 = vadd.f32 %v671, %v682
        %684 = vrot.lane.b32.xlu0 %v615, 125
        %v685 = vpop.permute.xlu0 %684
        %v686 = vld [vmem:[%s4 + $0x6] sm:$0x1]
        %v687 = vlaneseq
        %v688 = vshrl.u32 %v687, 7
        %v689 = vsub.s32 0, %v688
        %v690 = vrot.slane %v686, %v689
        %v691 = vmul.f32 %v685, %v690
        %v692 = vadd.f32 %v683, %v691
        %v694 = vrot.slane %v615, 4
        %696 = vrot.lane.b32.xlu0 %v694, 124
        %v697 = vpop.permute.xlu0 %696
        %v698 = vld [vmem:[%s4 + $0x7] sm:$0x1]
        %v699 = vlaneseq
        %v700 = vshrl.u32 %v699, 7
        %v701 = vsub.s32 0, %v700
        %v702 = vrot.slane %v698, %v701
        %v703 = vmul.f32 %v697, %v702
        %v704 = vadd.f32 %v692, %v703
        %705 = vrot.lane.b32.xlu0 %v620, 123
        %v706 = vpop.permute.xlu0 %705
        %v707 = vld [vmem:[%s4 + $0x8] sm:$0x1]
        %v708 = vlaneseq
        %v709 = vshrl.u32 %v708, 7
        %v710 = vsub.s32 0, %v709
        %v711 = vrot.slane %v707, %v710
        %v712 = vmul.f32 %v706, %v711
        %v713 = vadd.f32 %v704, %v712
        %v714 = vld [vmem:[%s3] sm:$0xf]
        %716 = vset.pattern.permute.xlu0 0
        %717 = vperm.xlu0 %716, %v714
        %v718 = vpop.permute.xlu0 %717
        %v720 = vadd.f32 %v713, %v718
        %v721 = vld [vmem:[#allocation2] sm:$0xff]
        %v722 = vld [vmem:[#allocation2 + $0x8] sm:$0xff]
        %v723 = vld [vmem:[#allocation2 + $0x10] sm:$0xff]
        %v724 = vld [vmem:[#allocation2 + $0x18] sm:$0xff]
        %v725 = vld [vmem:[#allocation2 + $0x20] sm:$0xff]
        %v726 = vld [vmem:[#allocation2 + $0x28] sm:$0xff]
        %v727 = vld [vmem:[#allocation2 + $0x30] sm:$0xff]
        %v728 = vld [vmem:[#allocation2 + $0x38] sm:$0xff]
        %v729 = vld [vmem:[#allocation2 + $0x40] sm:$0xff]
        %v730 = vld [vmem:[#allocation2 + $0x48] sm:$0xff]
        %v731 = vld [vmem:[#allocation2 + $0x50] sm:$0xff]
        %v732 = vld [vmem:[#allocation2 + $0x58] sm:$0xff]
        %v733 = vld [vmem:[#allocation2 + $0x60] sm:$0xff]
        %v734 = vld [vmem:[#allocation2 + $0x68] sm:$0xff]
        %v735 = vld [vmem:[#allocation2 + $0x70] sm:$0xff]
        %v736 = vld [vmem:[#allocation2 + $0x78] sm:$0xff]
        %737 = vmatprep.subr.mxu0 0.0
        %738 = vmatpush1.msra.mxu0 %v721
        %739 = vmatprep.subr.mxu0 0.0
        %740 = vmatpush1.msra.mxu0 %v722
        %741 = vmatprep.subr.mxu0 0.0
        %742 = vmatpush1.msra.mxu0 %v723
        %743 = vmatprep.subr.mxu0 0.0
        %744 = vmatpush1.msra.mxu0 %v724
        %745 = vmatprep.subr.mxu0 0.0
        %746 = vmatpush1.msra.mxu0 %v725
        %747 = vmatprep.subr.mxu0 0.0
        %748 = vmatpush1.msra.mxu0 %v726
        %749 = vmatprep.subr.mxu0 0.0
        %750 = vmatpush1.msra.mxu0 %v727
        %751 = vmatprep.subr.mxu0 0.0
        %752 = vmatpush1.msra.mxu0 %v728
        %753 = vmatprep.subr.mxu0 0.0
        %754 = vmatpush1.msra.mxu0 %v729
        %755 = vmatprep.subr.mxu0 0.0
        %756 = vmatpush1.msra.mxu0 %v730
        %757 = vmatprep.subr.mxu0 0.0
        %758 = vmatpush1.msra.mxu0 %v731
        %759 = vmatprep.subr.mxu0 0.0
        %760 = vmatpush1.msra.mxu0 %v732
        %761 = vmatprep.subr.mxu0 0.0
        %762 = vmatpush1.msra.mxu0 %v733
        %763 = vmatprep.subr.mxu0 0.0
        %764 = vmatpush1.msra.mxu0 %v734
        %765 = vmatprep.subr.mxu0 0.0
        %766 = vmatpush1.msra.mxu0 %v735
        %767 = vmatprep.subr.mxu0 0.0
        %768 = vmatpush1.msra.mxu0 %v736
        %769 = vmatprep.subr.mxu0 0.0
        %770 = vmatpush1.msra.mxu0 0.0
        %771 = vmatprep.subr.mxu0 0.0
        %772 = vmatpush1.msra.mxu0 0.0
        %773 = vmatprep.subr.mxu0 0.0
        %774 = vmatpush1.msra.mxu0 0.0
        %775 = vmatprep.subr.mxu0 0.0
        %776 = vmatpush1.msra.mxu0 0.0
        %777 = vmatprep.subr.mxu0 0.0
        %778 = vmatpush1.msra.mxu0 0.0
        %779 = vmatprep.subr.mxu0 0.0
        %780 = vmatpush1.msra.mxu0 0.0
        %781 = vmatprep.subr.mxu0 0.0
        %782 = vmatpush1.msra.mxu0 0.0
        %783 = vmatprep.subr.mxu0 0.0
        %784 = vmatpush1.msra.mxu0 0.0
        %785 = vmatprep.subr.mxu0 0.0
        %786 = vmatpush1.msra.mxu0 0.0
        %787 = vmatprep.subr.mxu0 0.0
        %788 = vmatpush1.msra.mxu0 0.0
        %789 = vmatprep.subr.mxu0 0.0
        %790 = vmatpush1.msra.mxu0 0.0
        %791 = vmatprep.subr.mxu0 0.0
        %792 = vmatpush1.msra.mxu0 0.0
        %793 = vmatprep.subr.mxu0 0.0
        %794 = vmatpush1.msra.mxu0 0.0
        %795 = vmatprep.subr.mxu0 0.0
        %796 = vmatpush1.msra.mxu0 0.0
        %797 = vmatprep.subr.mxu0 0.0
        %798 = vmatpush1.msra.mxu0 0.0
        %799 = vmatprep.subr.mxu0 0.0
        %800 = vmatpush1.msra.mxu0 0.0
        %801 = vmatprep.mubr.f32.mxu0 0.0
        %802 = vmatmul.mubr.f32.gmra.mrb[0].mxu0 %v720
        %v803 = vpop.f32.mrb[0].mxu0
        %v804 = vadd.f32 0.0, %v803
        %v805 = vpop.f32.mrb[0].mxu0
        %806 = vdwg.mxu0
        %v807 = vld [vmem:[%s5] sm:$0x3]
        %v809 = vsel %vm513, %v807, 0
        %v812 = vsel %vm529, %v804, 0
        %814 = vmatprep.subr.mxu0 0.0
        %815 = vmatpush1.msra.mxu0 %v812
        %816 = vmatprep.subr.mxu0 0.0
        %817 = vmatpush1.msra.mxu0 0.0
        %818 = vmatprep.subr.mxu0 0.0
        %819 = vmatpush1.msra.mxu0 0.0
        %820 = vmatprep.subr.mxu0 0.0
        %821 = vmatpush1.msra.mxu0 0.0
        %822 = vmatprep.subr.mxu0 0.0
        %823 = vmatpush1.msra.mxu0 0.0
        %824 = vmatprep.subr.mxu0 0.0
        %825 = vmatpush1.msra.mxu0 0.0
        %826 = vmatprep.subr.mxu0 0.0
        %827 = vmatpush1.msra.mxu0 0.0
        %828 = vmatprep.subr.mxu0 0.0
        %829 = vmatpush1.msra.mxu0 0.0
        %830 = vmatprep.subr.mxu0 0.0
        %831 = vmatpush1.msra.mxu0 0.0
        %832 = vmatprep.subr.mxu0 0.0
        %833 = vmatpush1.msra.mxu0 0.0
        %834 = vmatprep.subr.mxu0 0.0
        %835 = vmatpush1.msra.mxu0 0.0
        %836 = vmatprep.subr.mxu0 0.0
        %837 = vmatpush1.msra.mxu0 0.0
        %838 = vmatprep.subr.mxu0 0.0
        %839 = vmatpush1.msra.mxu0 0.0
        %840 = vmatprep.subr.mxu0 0.0
        %841 = vmatpush1.msra.mxu0 0.0
        %842 = vmatprep.subr.mxu0 0.0
        %843 = vmatpush1.msra.mxu0 0.0
        %844 = vmatprep.subr.mxu0 0.0
        %845 = vmatpush1.msra.mxu0 0.0
        %846 = vmatprep.subr.mxu0 0.0
        %847 = vmatpush1.msra.mxu0 0.0
        %848 = vmatprep.subr.mxu0 0.0
        %849 = vmatpush1.msra.mxu0 0.0
        %850 = vmatprep.subr.mxu0 0.0
        %851 = vmatpush1.msra.mxu0 0.0
        %852 = vmatprep.subr.mxu0 0.0
        %853 = vmatpush1.msra.mxu0 0.0
        %854 = vmatprep.subr.mxu0 0.0
        %855 = vmatpush1.msra.mxu0 0.0
        %856 = vmatprep.subr.mxu0 0.0
        %857 = vmatpush1.msra.mxu0 0.0
        %858 = vmatprep.subr.mxu0 0.0
        %859 = vmatpush1.msra.mxu0 0.0
        %860 = vmatprep.subr.mxu0 0.0
        %861 = vmatpush1.msra.mxu0 0.0
        %862 = vmatprep.subr.mxu0 0.0
        %863 = vmatpush1.msra.mxu0 0.0
        %864 = vmatprep.subr.mxu0 0.0
        %865 = vmatpush1.msra.mxu0 0.0
        %866 = vmatprep.subr.mxu0 0.0
        %867 = vmatpush1.msra.mxu0 0.0
        %868 = vmatprep.subr.mxu0 0.0
        %869 = vmatpush1.msra.mxu0 0.0
        %870 = vmatprep.subr.mxu0 0.0
        %871 = vmatpush1.msra.mxu0 0.0
        %872 = vmatprep.subr.mxu0 0.0
        %873 = vmatpush1.msra.mxu0 0.0
        %874 = vmatprep.subr.mxu0 0.0
        %875 = vmatpush1.msra.mxu0 0.0
        %876 = vmatprep.subr.mxu0 0.0
        %877 = vmatpush1.msra.mxu0 0.0
        %878 = vmatprep.mubr.f32.mxu0 0.0
        %879 = vmatmul.mubr.f32.gmra.mrb[0].mxu0 %v809
        %v880 = vpop.f32.mrb[0].mxu0
        %v881 = vadd.f32 0.0, %v880
        %v882 = vpop.f32.mrb[0].mxu0
        %883 = vdwg.mxu0
        %v884 = vmax.f32 %v881, 0.0
        %v885 = vld [vmem:[%s6] sm:$0xf]
        %vm886 = vcmask 15360
        %v888 = vsel %vm886, %v885, 0
        %vm890 = vcmask 1041408
        %v892 = vsel %vm890, %v884, 0
        %894 = vmatprep.subr.mxu0 0.0
        %895 = vmatpush1.msra.mxu0 %v892
        %896 = vmatprep.subr.mxu0 0.0
        %897 = vmatpush1.msra.mxu0 0.0
        %898 = vmatprep.subr.mxu0 0.0
        %899 = vmatpush1.msra.mxu0 0.0
        %900 = vmatprep.subr.mxu0 0.0
        %901 = vmatpush1.msra.mxu0 0.0
        %902 = vmatprep.subr.mxu0 0.0
        %903 = vmatpush1.msra.mxu0 0.0
        %904 = vmatprep.subr.mxu0 0.0
        %905 = vmatpush1.msra.mxu0 0.0
        %906 = vmatprep.subr.mxu0 0.0
        %907 = vmatpush1.msra.mxu0 0.0
        %908 = vmatprep.subr.mxu0 0.0
        %909 = vmatpush1.msra.mxu0 0.0
        %910 = vmatprep.subr.mxu0 0.0
        %911 = vmatpush1.msra.mxu0 0.0
        %912 = vmatprep.subr.mxu0 0.0
        %913 = vmatpush1.msra.mxu0 0.0
        %914 = vmatprep.subr.mxu0 0.0
        %915 = vmatpush1.msra.mxu0 0.0
        %916 = vmatprep.subr.mxu0 0.0
        %917 = vmatpush1.msra.mxu0 0.0
        %918 = vmatprep.subr.mxu0 0.0
        %919 = vmatpush1.msra.mxu0 0.0
        %920 = vmatprep.subr.mxu0 0.0
        %921 = vmatpush1.msra.mxu0 0.0
        %922 = vmatprep.subr.mxu0 0.0
        %923 = vmatpush1.msra.mxu0 0.0
        %924 = vmatprep.subr.mxu0 0.0
        %925 = vmatpush1.msra.mxu0 0.0
        %926 = vmatprep.subr.mxu0 0.0
        %927 = vmatpush1.msra.mxu0 0.0
        %928 = vmatprep.subr.mxu0 0.0
        %929 = vmatpush1.msra.mxu0 0.0
        %930 = vmatprep.subr.mxu0 0.0
        %931 = vmatpush1.msra.mxu0 0.0
        %932 = vmatprep.subr.mxu0 0.0
        %933 = vmatpush1.msra.mxu0 0.0
        %934 = vmatprep.subr.mxu0 0.0
        %935 = vmatpush1.msra.mxu0 0.0
        %936 = vmatprep.subr.mxu0 0.0
        %937 = vmatpush1.msra.mxu0 0.0
        %938 = vmatprep.subr.mxu0 0.0
        %939 = vmatpush1.msra.mxu0 0.0
        %940 = vmatprep.subr.mxu0 0.0
        %941 = vmatpush1.msra.mxu0 0.0
        %942 = vmatprep.subr.mxu0 0.0
        %943 = vmatpush1.msra.mxu0 0.0
        %944 = vmatprep.subr.mxu0 0.0
        %945 = vmatpush1.msra.mxu0 0.0
        %946 = vmatprep.subr.mxu0 0.0
        %947 = vmatpush1.msra.mxu0 0.0
        %948 = vmatprep.subr.mxu0 0.0
        %949 = vmatpush1.msra.mxu0 0.0
        %950 = vmatprep.subr.mxu0 0.0
        %951 = vmatpush1.msra.mxu0 0.0
        %952 = vmatprep.subr.mxu0 0.0
        %953 = vmatpush1.msra.mxu0 0.0
        %954 = vmatprep.subr.mxu0 0.0
        %955 = vmatpush1.msra.mxu0 0.0
        %956 = vmatprep.subr.mxu0 0.0
        %957 = vmatpush1.msra.mxu0 0.0
        %958 = vmatprep.mubr.f32.mxu0 0.0
        %959 = vmatmul.mubr.f32.gmra.mrb[0].mxu0 %v888
        %v960 = vpop.f32.mrb[0].mxu0
        %v961 = vadd.f32 0.0, %v960
        %v962 = vpop.f32.mrb[0].mxu0
        %963 = vdwg.mxu0
        %v964 = vsub.f32 0.0, %v961
        %v965 = vmul.f32 %v964, 1.442695
        %v966 = vpow.pop %v965
        %v967 = vadd.f32 %v966, 1.0
        %v968 = vrcp.pop %v967
        %v969 = vmul.f32 1.0, %v968
        %v970 = vadd.f32 %v969, 1.0
        %v971 = vld [vmem:[#allocation4] sm:$0xff]
        %vm972 = vcmask 64512
        %v974 = vsel %vm972, %v970, 0
        %976 = vmatprep.subr.mxu0 0.0
        %977 = vmatpush1.msra.mxu0 %v971
        %978 = vmatprep.subr.mxu0 0.0
        %979 = vmatpush1.msra.mxu0 0.0
        %980 = vmatprep.subr.mxu0 0.0
        %981 = vmatpush1.msra.mxu0 0.0
        %982 = vmatprep.subr.mxu0 0.0
        %983 = vmatpush1.msra.mxu0 0.0
        %984 = vmatprep.subr.mxu0 0.0
        %985 = vmatpush1.msra.mxu0 0.0
        %986 = vmatprep.subr.mxu0 0.0
        %987 = vmatpush1.msra.mxu0 0.0
        %988 = vmatprep.subr.mxu0 0.0
        %989 = vmatpush1.msra.mxu0 0.0
        %990 = vmatprep.subr.mxu0 0.0
        %991 = vmatpush1.msra.mxu0 0.0
        %992 = vmatprep.subr.mxu0 0.0
        %993 = vmatpush1.msra.mxu0 0.0
        %994 = vmatprep.subr.mxu0 0.0
        %995 = vmatpush1.msra.mxu0 0.0
        %996 = vmatprep.subr.mxu0 0.0
        %997 = vmatpush1.msra.mxu0 0.0
        %998 = vmatprep.subr.mxu0 0.0
        %999 = vmatpush1.msra.mxu0 0.0
        %1000 = vmatprep.subr.mxu0 0.0
        %1001 = vmatpush1.msra.mxu0 0.0
        %1002 = vmatprep.subr.mxu0 0.0
        %1003 = vmatpush1.msra.mxu0 0.0
        %1004 = vmatprep.subr.mxu0 0.0
        %1005 = vmatpush1.msra.mxu0 0.0
        %1006 = vmatprep.subr.mxu0 0.0
        %1007 = vmatpush1.msra.mxu0 0.0
        %1008 = vmatprep.subr.mxu0 0.0
        %1009 = vmatpush1.msra.mxu0 0.0
        %1010 = vmatprep.subr.mxu0 0.0
        %1011 = vmatpush1.msra.mxu0 0.0
        %1012 = vmatprep.subr.mxu0 0.0
        %1013 = vmatpush1.msra.mxu0 0.0
        %1014 = vmatprep.subr.mxu0 0.0
        %1015 = vmatpush1.msra.mxu0 0.0
        %1016 = vmatprep.subr.mxu0 0.0
        %1017 = vmatpush1.msra.mxu0 0.0
        %1018 = vmatprep.subr.mxu0 0.0
        %1019 = vmatpush1.msra.mxu0 0.0
        %1020 = vmatprep.subr.mxu0 0.0
        %1021 = vmatpush1.msra.mxu0 0.0
        %1022 = vmatprep.subr.mxu0 0.0
        %1023 = vmatpush1.msra.mxu0 0.0
        %1024 = vmatprep.subr.mxu0 0.0
        %1025 = vmatpush1.msra.mxu0 0.0
        %1026 = vmatprep.subr.mxu0 0.0
        %1027 = vmatpush1.msra.mxu0 0.0
        %1028 = vmatprep.subr.mxu0 0.0
        %1029 = vmatpush1.msra.mxu0 0.0
        %1030 = vmatprep.subr.mxu0 0.0
        %1031 = vmatpush1.msra.mxu0 0.0
        %1032 = vmatprep.subr.mxu0 0.0
        %1033 = vmatpush1.msra.mxu0 0.0
        %1034 = vmatprep.subr.mxu0 0.0
        %1035 = vmatpush1.msra.mxu0 0.0
        %1036 = vmatprep.subr.mxu0 0.0
        %1037 = vmatpush1.msra.mxu0 0.0
        %1038 = vmatprep.subr.mxu0 0.0
        %1039 = vmatpush1.msra.mxu0 0.0
        %1040 = vmatprep.mubr.f32.mxu0 0.0
        %1041 = vmatmul.mubr.f32.gmra.mrb[0].mxu0 %v974
        %v1042 = vpop.f32.mrb[0].mxu0
        %v1043 = vadd.f32 0.0, %v1042
        %v1044 = vpop.f32.mrb[0].mxu0
        %1045 = vdwg.mxu0
        %v1046 = vmul.f32 %v720, %v1043
        %v1047 = vpack.c.bf16 %v1046, %v1046
        %1048 = vst [vmem:[%s400] sm:$0x3] %v1047
        %p1049 = scmp.lt.s32.totalorder %s26, 1
        %s1050 = scalar_select %p1049, %s26, 1
        %p1051 = scmp.lt.s32.totalorder %s27, 1
        %s1052 = scalar_select %p1051, %s27, 1
        %s1053 = smul.addr %s1050, 2
        %s1054 = sadd.s32 %s1052, %s1053
        %s1055 = smul.addr %s1054, 2
        %s1056 = scalar_lea.vmem %s9, %s1055
        // Predicated region
        $region65: #{dpconv_forward.4} parent=55 // pred_check
          %p1057 = pneg %p253
        $region66: #{dpconv_forward.4} parent=55 // pred_check_branch
          %1059 = sbr.rel (%p1057) target = $region68
        $region67: #{dpconv_forward.4} parent=55 // pred_region
          _
        $region68: #{dpconv_forward.4} parent=55 // pred_fallthru
          _
      $region56: #{dpconv_forward.4} parent=5 // pred_fallthru
        _
      %p1060 = scmp.le.s32.totalorder 2, %s17
      // Predicated region
      $region69: #{dpconv_forward.4} parent=5 // pred_check
        %p1061 = pneg %p1060
      $region70: #{dpconv_forward.4} parent=5 // pred_check_branch
        %1063 = sbr.rel (%p1061) target = $region72
      $region71: #{dpconv_forward.4} parent=5 // pred_region
        %s1064 = ssub.s32 %s17, 2
        // Predicated region
        $region73: #{dpconv_forward.4} parent=71 // pred_check
          %p1065 = pneg %p259
        $region74: #{dpconv_forward.4} parent=71 // pred_check_branch
          %1067 = sbr.rel (%p1065) target = $region76
        $region75: #{dpconv_forward.4} parent=71 // pred_region
          %p1068 = scmp.lt.s32.totalorder %s28, 1
          %s1069 = scalar_select %p1068, %s28, 1
          %p1070 = scmp.lt.s32.totalorder %s29, 1
          %s1071 = scalar_select %p1070, %s29, 1
          %s1072 = smul.addr %s1069, 2
          %s1073 = sadd.s32 %s1071, %s1072
          %s1074 = smul.addr %s1073, 2
          %s1075 = scalar_lea.vmem %s9, %s1074
        $region76: #{dpconv_forward.4} parent=71 // pred_fallthru
          _
      $region72: #{dpconv_forward.4} parent=5 // pred_fallthru
        _
    $region6: #{dpconv_forward.4} parent=1 // loop_footer
      %s21 = sadd.s32 1, %s17
    $region7: #{dpconv_forward.4} parent=1 // loop_footer_branch
      %16 = sbr.rel target = $region3
    $region8: #{dpconv_forward.4} parent=1 // loop_exit
      _
    %1076 = vsyncpa [#allocation3], 1
    %s1077 = scalar_lea.sflag [#allocation3], 1
    %1078 = vsyncpa %s1077, 1
    %1079 = vsyncpa [#allocation5], 1

// kernel: dpconv_forward.5
$region0: #{dpconv_forward.5}
  #allocation0 [shape = 'u32[]', space=smem, size = 0x4, offset = 0x4, fixed_abs, tag = 'smem constant byte address 0x4 - core index']
  #allocation1 [shape = 'u32[144,128]{1,0:T(1,128)}', space=vmem, size = 0x12000, scoped, tag = 'internal scratch']
  %s0 = inlined_call_operand.vmem [shape: bf16[2,4,256], index: 0, kind: input, shape index: {}]
  %s1 = inlined_call_operand.vmem [shape: bf16[2,4,256], index: 1, kind: input, shape index: {}]
  %s2 = inlined_call_operand.vmem [shape: f32[1,256], index: 2, kind: input, shape index: {}]
  %s3 = inlined_call_operand.vmem [shape: bf16[4,4], index: 3, kind: input, shape index: {}]
  %s4 = inlined_call_operand.vmem [shape: bf16[4,4], index: 4, kind: input, shape index: {}]
  %s5 = inlined_call_operand.vmem [shape: f32[4,1], index: 5, kind: input, shape index: {}]
  %s6 = inlined_call_operand.vmem [shape: f32[2,4,256], index: 6, kind: output, shape index: {}]
  %s7 = sld [smem:[#allocation0]]
  $region57: #{dpconv_forward.5} parent=0
    _
  %s9 = ssub.s32 1, %s7
  %s10 = scalar_select 0, %s9, %s7
  loop: start=0, step=1, limit=4
  $region2: #{dpconv_forward.5} parent=0 // loop_pre_header
    _
  $region3: #{dpconv_forward.5} parent=0 // loop_header
    %s12 = sphi 0, %s16
    %p13 = scmp.ge.s32.totalorder %s12, 4
    %s19 = sphi 0, %s31
    %s20 = sphi 0, %s27
    %s21 = sphi 0, %s19
    %s22 = sphi 0, %s20
    %s23 = sphi 0, %s21
    %s24 = sphi 0, %s22
    %s36 = sphi 0, %s38
    %s39 = sphi 0, %s36
    %s40 = sphi 0, %s39
    %s56 = sphi 0, %s40
    %s64 = sphi 0, %s66
    %s67 = sphi 0, %s64
    %s68 = sphi 0, %s67
    %s84 = sphi 0, %s68
    %s90 = sphi 0, %s92
    %s93 = sphi 0, %s90
    %s94 = sphi 0, %s93
    %s110 = sphi 0, %s94
    %s114 = sphi 0, %s114
    %s116 = sphi 0, %s114
    %s117 = sphi 0, %s116
    %s131 = sphi 0, %s117
    %s135 = sphi 0, %s135
    %s137 = sphi 0, %s135
    %s138 = sphi 0, %s137
    %s152 = sphi 0, %s138
    %s156 = sphi 0, %s156
    %s158 = sphi 0, %s156
    %s159 = sphi 0, %s158
    %s173 = sphi 0, %s159
    %s181 = sphi 0, %s183
    %s184 = sphi 0, %s181
    %s185 = sphi 0, %s184
    %s201 = sphi 0, %s185
  $region4: #{dpconv_forward.5} parent=0 // loop_header_branch
    %15 = sbr.rel (%p13) target = $region8
  $region5: #{dpconv_forward.5} parent=0 // loop_body
    %s17 = ssub.s32 %s12, 1
    %s18 = ssub.s32 %s12, 2
    %s25 = sadd.s32 1, %s20
    %p26 = scmp.ge.s32.totalorder %s25, 1
    %s27 = scalar_select %p26, 0, %s25
    %s28 = sadd.s32 1, %s19
    %s29 = scalar_select %p26, %s28, %s19
    %p30 = scmp.ge.s32.totalorder %s29, 2
    %s31 = scalar_select %p30, 0, %s29
    %s32 = ssub.s32 %s19, %s31
    %s33 = ssub.s32 %s20, %s27
    %s34 = sor.u32 %s32, %s33
    %p35 = scmp.eq.s32.totalorder %s34, 0
    %s37 = sadd.s32 %s36, 1
    %s38 = scalar_select %p35, %s36, %s37
    %p41 = pneg %p35
    %p42 = scmp.eq.s32.totalorder %s12, 1
    %p43 = por %p41, %p42
    %p44 = scmp.ne.s32.totalorder %s36, %s39
    %p45 = scmp.eq.s32.totalorder %s12, 0
    %p46 = por %p44, %p45
    %p47 = scmp.ne.s32.totalorder %s36, %s39
    %p48 = scmp.eq.s32.totalorder %s17, 1
    %p49 = por %p47, %p48
    %p50 = scmp.ne.s32.totalorder %s39, %s40
    %p51 = scmp.eq.s32.totalorder %s17, 0
    %p52 = por %p50, %p51
    %p53 = scmp.ne.s32.totalorder %s39, %s40
    %p54 = scmp.eq.s32.totalorder %s18, 1
    %p55 = por %p53, %p54
    %p57 = scmp.ne.s32.totalorder %s40, %s56
    %p58 = scmp.eq.s32.totalorder %s18, 0
    %p59 = por %p57, %p58
    %s60 = ssub.s32 %s19, %s31
    %s61 = ssub.s32 %s20, %s27
    %s62 = sor.u32 %s60, %s61
    %p63 = scmp.eq.s32.totalorder %s62, 0
    %s65 = sadd.s32 %s64, 1
    %s66 = scalar_select %p63, %s64, %s65
    %p69 = pneg %p63
    %p70 = scmp.eq.s32.totalorder %s12, 1
    %p71 = por %p69, %p70
    %p72 = scmp.ne.s32.totalorder %s64, %s67
    %p73 = scmp.eq.s32.totalorder %s12, 0
    %p74 = por %p72, %p73
    %p75 = scmp.ne.s32.totalorder %s64, %s67
    %p76 = scmp.eq.s32.totalorder %s17, 1
    %p77 = por %p75, %p76
    %p78 = scmp.ne.s32.totalorder %s67, %s68
    %p79 = scmp.eq.s32.totalorder %s17, 0
    %p80 = por %p78, %p79
    %p81 = scmp.ne.s32.totalorder %s67, %s68
    %p82 = scmp.eq.s32.totalorder %s18, 1
    %p83 = por %p81, %p82
    %p85 = scmp.ne.s32.totalorder %s68, %s84
    %p86 = scmp.eq.s32.totalorder %s18, 0
    %p87 = por %p85, %p86
    %s88 = ssub.s32 %s20, %s27
    %p89 = scmp.eq.s32.totalorder %s88, 0
    %s91 = sadd.s32 %s90, 1
    %s92 = scalar_select %p89, %s90, %s91
    %p95 = pneg %p89
    %p96 = scmp.eq.s32.totalorder %s12, 1
    %p97 = por %p95, %p96
    %p98 = scmp.ne.s32.totalorder %s90, %s93
    %p99 = scmp.eq.s32.totalorder %s12, 0
    %p100 = por %p98, %p99
    %p101 = scmp.ne.s32.totalorder %s90, %s93
    %p102 = scmp.eq.s32.totalorder %s17, 1
    %p103 = por %p101, %p102
    %p104 = scmp.ne.s32.totalorder %s93, %s94
    %p105 = scmp.eq.s32.totalorder %s17, 0
    %p106 = por %p104, %p105
    %p107 = scmp.ne.s32.totalorder %s93, %s94
    %p108 = scmp.eq.s32.totalorder %s18, 1
    %p109 = por %p107, %p108
    %p111 = scmp.ne.s32.totalorder %s94, %s110
    %p112 = scmp.eq.s32.totalorder %s18, 0
    %p113 = por %p111, %p112
    %s115 = sadd.s32 %s114, 1
    %p118 = scmp.eq.s32.totalorder %s12, 1
    %p119 = scmp.ne.s32.totalorder %s114, %s116
    %p120 = scmp.eq.s32.totalorder %s12, 0
    %p121 = por %p119, %p120
    %p122 = scmp.ne.s32.totalorder %s114, %s116
    %p123 = scmp.eq.s32.totalorder %s17, 1
    %p124 = por %p122, %p123
    %p125 = scmp.ne.s32.totalorder %s116, %s117
    %p126 = scmp.eq.s32.totalorder %s17, 0
    %p127 = por %p125, %p126
    %p128 = scmp.ne.s32.totalorder %s116, %s117
    %p129 = scmp.eq.s32.totalorder %s18, 1
    %p130 = por %p128, %p129
    %p132 = scmp.ne.s32.totalorder %s117, %s131
    %p133 = scmp.eq.s32.totalorder %s18, 0
    %p134 = por %p132, %p133
    %s136 = sadd.s32 %s135, 1
    %p139 = scmp.eq.s32.totalorder %s12, 1
    %p140 = scmp.ne.s32.totalorder %s135, %s137
    %p141 = scmp.eq.s32.totalorder %s12, 0
    %p142 = por %p140, %p141
    %p143 = scmp.ne.s32.totalorder %s135, %s137
    %p144 = scmp.eq.s32.totalorder %s17, 1
    %p145 = por %p143, %p144
    %p146 = scmp.ne.s32.totalorder %s137, %s138
    %p147 = scmp.eq.s32.totalorder %s17, 0
    %p148 = por %p146, %p147
    %p149 = scmp.ne.s32.totalorder %s137, %s138
    %p150 = scmp.eq.s32.totalorder %s18, 1
    %p151 = por %p149, %p150
    %p153 = scmp.ne.s32.totalorder %s138, %s152
    %p154 = scmp.eq.s32.totalorder %s18, 0
    %p155 = por %p153, %p154
    %s157 = sadd.s32 %s156, 1
    %p160 = scmp.eq.s32.totalorder %s12, 1
    %p161 = scmp.ne.s32.totalorder %s156, %s158
    %p162 = scmp.eq.s32.totalorder %s12, 0
    %p163 = por %p161, %p162
    %p164 = scmp.ne.s32.totalorder %s156, %s158
    %p165 = scmp.eq.s32.totalorder %s17, 1
    %p166 = por %p164, %p165
    %p167 = scmp.ne.s32.totalorder %s158, %s159
    %p168 = scmp.eq.s32.totalorder %s17, 0
    %p169 = por %p167, %p168
    %p170 = scmp.ne.s32.totalorder %s158, %s159
    %p171 = scmp.eq.s32.totalorder %s18, 1
    %p172 = por %p170, %p171
    %p174 = scmp.ne.s32.totalorder %s159, %s173
    %p175 = scmp.eq.s32.totalorder %s18, 0
    %p176 = por %p174, %p175
    %s177 = ssub.s32 %s19, %s31
    %s178 = ssub.s32 %s20, %s27
    %s179 = sor.u32 %s177, %s178
    %p180 = scmp.eq.s32.totalorder %s179, 0
    %s182 = sadd.s32 %s181, 1
    %s183 = scalar_select %p180, %s181, %s182
    %p186 = pneg %p180
    %p187 = scmp.eq.s32.totalorder %s12, 1
    %p188 = por %p186, %p187
    %p189 = scmp.ne.s32.totalorder %s181, %s184
    %p190 = scmp.eq.s32.totalorder %s12, 0
    %p191 = por %p189, %p190
    %p192 = scmp.ne.s32.totalorder %s181, %s184
    %p193 = scmp.eq.s32.totalorder %s17, 1
    %p194 = por %p192, %p193
    %p195 = scmp.ne.s32.totalorder %s184, %s185
    %p196 = scmp.eq.s32.totalorder %s17, 0
    %p197 = por %p195, %p196
    %p198 = scmp.ne.s32.totalorder %s184, %s185
    %p199 = scmp.eq.s32.totalorder %s18, 1
    %p200 = por %p198, %p199
    %p202 = scmp.ne.s32.totalorder %s185, %s201
    %p203 = scmp.eq.s32.totalorder %s18, 0
    %p204 = por %p202, %p203
    %p205 = scmp.le.s32.totalorder 1, %s12
    %p206 = scmp.lt.s32.totalorder %s12, 3
    %p207 = pnand %p205, %p206
    %p208 = pneg %p207
    // Predicated region
    $region9: #{dpconv_forward.5} parent=5 // pred_check
      _
    $region10: #{dpconv_forward.5} parent=5 // pred_check_branch
      %210 = sbr.rel (%p207) target = $region12
    $region11: #{dpconv_forward.5} parent=5 // pred_region
      %s211 = ssub.s32 %s12, 1
      // Predicated region
      $region13: #{dpconv_forward.5} parent=11 // pred_check
        %p212 = pneg %p106
      $region14: #{dpconv_forward.5} parent=11 // pred_check_branch
        %214 = sbr.rel (%p212) target = $region16
      $region15: #{dpconv_forward.5} parent=11 // pred_region
        %s215 = smul.u32 2, %s22
        %p216 = scmp.lt.s32.totalorder %s215, 1
        %s217 = scalar_select %p216, %s215, 1
        %s218 = scalar_lea.vmem %s2, %s217
        %s219 = smul.u32 2, %s22
      $region16: #{dpconv_forward.5} parent=11 // pred_fallthru
        _
      // Predicated region
      $region17: #{dpconv_forward.5} parent=11 // pred_check
        %p220 = pneg %p127
      $region18: #{dpconv_forward.5} parent=11 // pred_check_branch
        %222 = sbr.rel (%p220) target = $region20
      $region19: #{dpconv_forward.5} parent=11 // pred_region
        _
      $region20: #{dpconv_forward.5} parent=11 // pred_fallthru
        _
      // Predicated region
      $region21: #{dpconv_forward.5} parent=11 // pred_check
        %p223 = pneg %p148
      $region22: #{dpconv_forward.5} parent=11 // pred_check_branch
        %225 = sbr.rel (%p223) target = $region24
      $region23: #{dpconv_forward.5} parent=11 // pred_region
        _
      $region24: #{dpconv_forward.5} parent=11 // pred_fallthru
        _
      // Predicated region
      $region25: #{dpconv_forward.5} parent=11 // pred_check
        %p226 = pneg %p169
      $region26: #{dpconv_forward.5} parent=11 // pred_check_branch
        %228 = sbr.rel (%p226) target = $region28
      $region27: #{dpconv_forward.5} parent=11 // pred_region
        _
      $region28: #{dpconv_forward.5} parent=11 // pred_fallthru
        _
    $region12: #{dpconv_forward.5} parent=5 // pred_fallthru
      _
    %p229 = scmp.lt.s32.totalorder %s12, 2
    // Predicated region
    $region29: #{dpconv_forward.5} parent=5 // pred_check
      %p230 = pneg %p229
    $region30: #{dpconv_forward.5} parent=5 // pred_check_branch
      %232 = sbr.rel (%p230) target = $region32
    $region31: #{dpconv_forward.5} parent=5 // pred_region
      // Predicated region
      $region33: #{dpconv_forward.5} parent=31 // pred_check
        %p233 = pneg %p46
      $region34: #{dpconv_forward.5} parent=31 // pred_check_branch
        %235 = sbr.rel (%p233) target = $region36
      $region35: #{dpconv_forward.5} parent=31 // pred_region
        %s236 = smul.u32 2, %s20
        %p237 = scmp.lt.s32.totalorder %s19, 1
        %s238 = scalar_select %p237, %s19, 1
        %p239 = scmp.lt.s32.totalorder %s236, 1
        %s240 = scalar_select %p239, %s236, 1
        %s241 = smul.addr %s238, 2
        %s242 = sadd.s32 %s240, %s241
        %s243 = smul.addr %s242, 2
        %s244 = scalar_lea.vmem %s0, %s243
        %s245 = smul.u32 2, %s20
      $region36: #{dpconv_forward.5} parent=31 // pred_fallthru
        _
      // Predicated region
      $region37: #{dpconv_forward.5} parent=31 // pred_check
        %p246 = pneg %p74
      $region38: #{dpconv_forward.5} parent=31 // pred_check_branch
        %248 = sbr.rel (%p246) target = $region40
      $region39: #{dpconv_forward.5} parent=31 // pred_region
        %s249 = smul.u32 2, %s20
        %p250 = scmp.lt.s32.totalorder %s19, 1
        %s251 = scalar_select %p250, %s19, 1
        %p252 = scmp.lt.s32.totalorder %s249, 1
        %s253 = scalar_select %p252, %s249, 1
        %s254 = smul.addr %s251, 2
        %s255 = sadd.s32 %s253, %s254
        %s256 = smul.addr %s255, 2
        %s257 = scalar_lea.vmem %s1, %s256
        %s258 = smul.u32 2, %s20
      $region40: #{dpconv_forward.5} parent=31 // pred_fallthru
        _
    $region32: #{dpconv_forward.5} parent=5 // pred_fallthru
      _
    %p259 = scmp.le.s32.totalorder 1, %s12
    %p260 = scmp.lt.s32.totalorder %s12, 3
    %p261 = pnand %p259, %p260
    %p262 = pneg %p261
    // Predicated region
    $region41: #{dpconv_forward.5} parent=5 // pred_check
      _
    $region42: #{dpconv_forward.5} parent=5 // pred_check_branch
      %264 = sbr.rel (%p261) target = $region44
    $region43: #{dpconv_forward.5} parent=5 // pred_region
      %s265 = ssub.s32 %s12, 1
      %s266 = smul.u32 2, %s22
      %p267 = scmp.lt.s32.totalorder %s21, 1
      %s268 = scalar_select %p267, %s21, 1
      %p269 = scmp.lt.s32.totalorder %s266, 1
      %s270 = scalar_select %p269, %s266, 1
      %s271 = smul.addr %s268, 2
      %s272 = sadd.s32 %s270, %s271
      %s273 = smul.addr %s272, 2
      %s274 = scalar_lea.vmem %s0, %s273
      %p275 = pneg %p52
      %p276 = pneg %p49
      %s277 = smul.u32 2, %s22
      %p278 = scmp.lt.s32.totalorder %s21, 1
      %s279 = scalar_select %p278, %s21, 1
      %p280 = scmp.lt.s32.totalorder %s277, 1
      %s281 = scalar_select %p280, %s277, 1
      %s282 = smul.addr %s279, 2
      %s283 = sadd.s32 %s281, %s282
      %s284 = smul.addr %s283, 2
      %s285 = scalar_lea.vmem %s1, %s284
      %p286 = pneg %p80
      %p287 = pneg %p77
      %s288 = smul.u32 2, %s22
      %p289 = scmp.lt.s32.totalorder %s288, 1
      %s290 = scalar_select %p289, %s288, 1
      %s291 = scalar_lea.vmem %s2, %s290
      %p292 = pneg %p106
      %p293 = pneg %p103
      %p294 = pneg %p127
      %p295 = pneg %p124
      %p296 = pneg %p148
      %p297 = pneg %p145
      %p298 = pneg %p169
      %p299 = pneg %p166
      %p300 = pneg %p197
      %p301 = pneg %p194
      %s302 = smul.u32 2, %s22
      %p303 = scmp.lt.s32.totalorder %s21, 1
      %s304 = scalar_select %p303, %s21, 1
      %p305 = scmp.lt.s32.totalorder %s302, 1
      %s306 = scalar_select %p305, %s302, 1
      %s307 = smul.addr %s304, 2
      %s308 = sadd.s32 %s306, %s307
      %s309 = smul.addr %s308, 4
      %s310 = scalar_lea.vmem %s6, %s309
      %s311 = smul.u32 2, %s22
      %p312 = scmp.lt.s32.totalorder %s21, 1
      %s313 = scalar_select %p312, %s21, 1
      %p314 = scmp.lt.s32.totalorder %s311, 1
      %s315 = scalar_select %p314, %s311, 1
      %s316 = smul.addr %s313, 2
      %s317 = sadd.s32 %s315, %s316
      %s318 = smul.addr %s317, 2
      %s319 = scalar_lea.vmem %s0, %s318
      %s320 = smul.u32 2, %s22
      %s321 = smul.u32 2, %s22
      %p322 = scmp.lt.s32.totalorder %s21, 1
      %s323 = scalar_select %p322, %s21, 1
      %p324 = scmp.lt.s32.totalorder %s321, 1
      %s325 = scalar_select %p324, %s321, 1
      %s326 = smul.addr %s323, 2
      %s327 = sadd.s32 %s325, %s326
      %s328 = smul.addr %s327, 2
      %s329 = scalar_lea.vmem %s1, %s328
      %s330 = smul.u32 2, %s22
      %s331 = smul.u32 2, %s22
      %p332 = scmp.lt.s32.totalorder %s331, 1
      %s333 = scalar_select %p332, %s331, 1
      %s334 = scalar_lea.vmem %s2, %s333
      %s335 = smul.u32 2, %s22
      %s336 = smul.u32 2, %s22
      %p337 = scmp.lt.s32.totalorder %s21, 1
      %s338 = scalar_select %p337, %s21, 1
      %p339 = scmp.lt.s32.totalorder %s336, 1
      %s340 = scalar_select %p339, %s336, 1
      %s341 = smul.addr %s338, 2
      %s342 = sadd.s32 %s340, %s341
      %s343 = smul.addr %s342, 4
      %s344 = scalar_lea.vmem %s6, %s343
      %s345 = smul.u32 2, %s22
      %v347 = vld [vmem:[%s3] sm:$0x3]
      %v348 = vld [vmem:[%s319] sm:$0xf]
      %v351 = vunpack.c.l.s4 1983009808
      %v352 = vunpack.c.0.s8 %v351
      %v353 = vlaneseq
      %v354 = vshrl.u32 %v353, 7
      %v355 = vsub.s32 %v352, %v354
      %v356 = vrot.slane %v348, %v355
      %v357 = vcombine.high %v356, %v356
      %vm358 = vcmask 31744
      %v360 = vsel %vm358, %v347, 0
      %vm362 = vcmask 1041408
      %v364 = vsel %vm362, %v356, 0
      %v367 = vsel %vm362, %v357, 0
      %369 = vmatprep.subr.bf16.mxu0 %v367
      %370 = vmatpush1.bf16.msra.mxu0 %v364
      %371 = vmatprep.subr.bf16.mxu0 0
      %372 = vmatpush1.bf16.msra.mxu0 0
      %373 = vmatprep.subr.bf16.mxu0 0
      %374 = vmatpush1.bf16.msra.mxu0 0
      %375 = vmatprep.subr.bf16.mxu0 0
      %376 = vmatpush1.bf16.msra.mxu0 0
      %377 = vmatprep.subr.bf16.mxu0 0
      %378 = vmatpush1.bf16.msra.mxu0 0
      %379 = vmatprep.subr.bf16.mxu0 0
      %380 = vmatpush1.bf16.msra.mxu0 0
      %381 = vmatprep.subr.bf16.mxu0 0
      %382 = vmatpush1.bf16.msra.mxu0 0
      %383 = vmatprep.subr.bf16.mxu0 0
      %384 = vmatpush1.bf16.msra.mxu0 0
      %385 = vmatprep.subr.bf16.mxu0 0
      %386 = vmatpush1.bf16.msra.mxu0 0
      %387 = vmatprep.subr.bf16.mxu0 0
      %388 = vmatpush1.bf16.msra.mxu0 0
      %389 = vmatprep.subr.bf16.mxu0 0
      %390 = vmatpush1.bf16.msra.mxu0 0
      %391 = vmatprep.subr.bf16.mxu0 0
      %392 = vmatpush1.bf16.msra.mxu0 0
      %393 = vmatprep.subr.bf16.mxu0 0
      %394 = vmatpush1.bf16.msra.mxu0 0
      %395 = vmatprep.subr.bf16.mxu0 0
      %396 = vmatpush1.bf16.msra.mxu0 0
      %397 = vmatprep.subr.bf16.mxu0 0
      %398 = vmatpush1.bf16.msra.mxu0 0
      %399 = vmatprep.subr.bf16.mxu0 0
      %400 = vmatpush1.bf16.msra.mxu0 0
      %401 = vmatprep.mubr.bf16.mxu0 0
      %402 = vmatmul.mubr.bf16.gmra.mrb[0].mxu0 %v360
      %v403 = vpop.f32.mrb[0].mxu0
      %v404 = vadd.f32 0.0, %v403
      %v405 = vpop.f32.mrb[0].mxu0
      %v406 = vadd.f32 0.0, %v405
      %v407 = vpop.f32.mrb[0].mxu0
      %v408 = vpop.f32.mrb[0].mxu0
      %409 = vdwg.mxu0
      %v410 = vld [vmem:[%s334] sm:$0x3]
      %v412 = vlaneseq
      %v413 = vshrl.u32 %v412, 7
      %v414 = vsub.s32 0, %v413
      %v415 = vrot.slane %v410, %v414
      %v416 = vlaneseq
      %v417 = vshrl.u32 %v416, 7
      %v418 = vsub.s32 1, %v417
      %v419 = vrot.slane %v410, %v418
      %v422 = vmul.f32 %v404, %v415
      %v423 = vmul.f32 %v406, %v419
      %v424 = vld [vmem:[%s4] sm:$0x3]
      %v425 = vld [vmem:[%s329] sm:$0xf]
      %v428 = vunpack.c.l.s4 1983009808
      %v429 = vunpack.c.0.s8 %v428
      %v430 = vlaneseq
      %v431 = vshrl.u32 %v430, 7
      %v432 = vsub.s32 %v429, %v431
      %v433 = vrot.slane %v425, %v432
      %v434 = vcombine.high %v433, %v433
      %v436 = vsel %vm358, %v424, 0
      %v439 = vsel %vm362, %v433, 0
      %v442 = vsel %vm362, %v434, 0
      %444 = vmatprep.subr.bf16.mxu0 %v442
      %445 = vmatpush1.bf16.msra.mxu0 %v439
      %446 = vmatprep.subr.bf16.mxu0 0
      %447 = vmatpush1.bf16.msra.mxu0 0
      %448 = vmatprep.subr.bf16.mxu0 0
      %449 = vmatpush1.bf16.msra.mxu0 0
      %450 = vmatprep.subr.bf16.mxu0 0
      %451 = vmatpush1.bf16.msra.mxu0 0
      %452 = vmatprep.subr.bf16.mxu0 0
      %453 = vmatpush1.bf16.msra.mxu0 0
      %454 = vmatprep.subr.bf16.mxu0 0
      %455 = vmatpush1.bf16.msra.mxu0 0
      %456 = vmatprep.subr.bf16.mxu0 0
      %457 = vmatpush1.bf16.msra.mxu0 0
      %458 = vmatprep.subr.bf16.mxu0 0
      %459 = vmatpush1.bf16.msra.mxu0 0
      %460 = vmatprep.subr.bf16.mxu0 0
      %461 = vmatpush1.bf16.msra.mxu0 0
      %462 = vmatprep.subr.bf16.mxu0 0
      %463 = vmatpush1.bf16.msra.mxu0 0
      %464 = vmatprep.subr.bf16.mxu0 0
      %465 = vmatpush1.bf16.msra.mxu0 0
      %466 = vmatprep.subr.bf16.mxu0 0
      %467 = vmatpush1.bf16.msra.mxu0 0
      %468 = vmatprep.subr.bf16.mxu0 0
      %469 = vmatpush1.bf16.msra.mxu0 0
      %470 = vmatprep.subr.bf16.mxu0 0
      %471 = vmatpush1.bf16.msra.mxu0 0
      %472 = vmatprep.subr.bf16.mxu0 0
      %473 = vmatpush1.bf16.msra.mxu0 0
      %474 = vmatprep.subr.bf16.mxu0 0
      %475 = vmatpush1.bf16.msra.mxu0 0
      %476 = vmatprep.mubr.bf16.mxu0 0
      %477 = vmatmul.mubr.bf16.gmra.mrb[0].mxu0 %v436
      %v478 = vpop.f32.mrb[0].mxu0
      %v479 = vadd.f32 0.0, %v478
      %v480 = vpop.f32.mrb[0].mxu0
      %v481 = vadd.f32 0.0, %v480
      %v482 = vpop.f32.mrb[0].mxu0
      %v483 = vpop.f32.mrb[0].mxu0
      %484 = vdwg.mxu0
      %v485 = vadd.f32 %v422, %v479
      %v486 = vadd.f32 %v423, %v481
      %v487 = vld [vmem:[%s5] sm:$0xf]
      %489 = vset.pattern.permute.xlu0 0
      %490 = vperm.xlu0 %489, %v487
      %v491 = vpop.permute.xlu0 %490
      %v493 = vadd.f32 %v485, %v491
      %v494 = vadd.f32 %v486, %v491
      %v497 = vcombine.low %v493, %v494
      %499 = vst [vmem:[%s344] sm:$0xff] %v497
      %s500 = smul.u32 2, %s22
      %p501 = scmp.lt.s32.totalorder %s21, 1
      %s502 = scalar_select %p501, %s21, 1
      %p503 = scmp.lt.s32.totalorder %s500, 1
      %s504 = scalar_select %p503, %s500, 1
      %s505 = smul.addr %s502, 2
      %s506 = sadd.s32 %s504, %s505
      %s507 = smul.addr %s506, 4
      %s508 = scalar_lea.vmem %s6, %s507
      // Predicated region
      $region45: #{dpconv_forward.5} parent=43 // pred_check
        %p509 = pneg %p194
      $region46: #{dpconv_forward.5} parent=43 // pred_check_branch
        %511 = sbr.rel (%p509) target = $region48
      $region47: #{dpconv_forward.5} parent=43 // pred_region
        %s512 = smul.u32 2, %s22
      $region48: #{dpconv_forward.5} parent=43 // pred_fallthru
        _
    $region44: #{dpconv_forward.5} parent=5 // pred_fallthru
      _
    %p513 = scmp.le.s32.totalorder 2, %s12
    // Predicated region
    $region49: #{dpconv_forward.5} parent=5 // pred_check
      %p514 = pneg %p513
    $region50: #{dpconv_forward.5} parent=5 // pred_check_branch
      %516 = sbr.rel (%p514) target = $region52
    $region51: #{dpconv_forward.5} parent=5 // pred_region
      %s517 = ssub.s32 %s12, 2
      // Predicated region
      $region53: #{dpconv_forward.5} parent=51 // pred_check
        %p518 = pneg %p200
      $region54: #{dpconv_forward.5} parent=51 // pred_check_branch
        %520 = sbr.rel (%p518) target = $region56
      $region55: #{dpconv_forward.5} parent=51 // pred_region
        %s521 = smul.u32 2, %s24
        %p522 = scmp.lt.s32.totalorder %s23, 1
        %s523 = scalar_select %p522, %s23, 1
        %p524 = scmp.lt.s32.totalorder %s521, 1
        %s525 = scalar_select %p524, %s521, 1
        %s526 = smul.addr %s523, 2
        %s527 = sadd.s32 %s525, %s526
        %s528 = smul.addr %s527, 4
        %s529 = scalar_lea.vmem %s6, %s528
      $region56: #{dpconv_forward.5} parent=51 // pred_fallthru
        _
    $region52: #{dpconv_forward.5} parent=5 // pred_fallthru
      _
  $region6: #{dpconv_forward.5} parent=0 // loop_footer
    %s16 = sadd.s32 1, %s12
  $region7: #{dpconv_forward.5} parent=0 // loop_footer_branch
    %11 = sbr.rel target = $region3
  $region8: #{dpconv_forward.5} parent=0 // loop_exit
    _

</llo_original>
